<compile_context>
chip_gen: v7x
topology: tpu7x:2x2x1
jax: 0.10.0
libtpu: 0.0.40
codegen_flags: <defaults>
</compile_context>

<pallas_src>
import functools

import jax
import jax.numpy as jnp
from jax.experimental import pallas as pl
from jax.experimental.pallas import tpu as pltpu


def _router_kernel(xp_ref, w1_ref, b1_ref, w2_ref, b2_ref, wls_ref, bl_ref,
                   out_ref, h1pad_ref, *, kernel_size):
    """One grid step == Bt batch elements.

    xp_ref   : (Bt, H, W, K*K*Cin)     im2col patches of the input (conv1 LHS)
    w1_ref   : (K*K*Cin, ngf)          conv1 weight, lane-dense 2D
    b1_ref   : (1, ngf)
    w2_ref   : (K*K*ngf, ngf)          conv2 weight, lane-dense 2D
    b2_ref   : (1, ngf)
    wls_ref  : (ngf, 1)                linear weight pre-scaled by 1/(H*W)
    bl_ref   : (1, 1)                  linear bias
    out_ref  : (1, Bt, 1)              per-tile output block (written once)
    h1pad_ref: (Bt, H+2p, W+2p, ngf)   VMEM scratch: conv1 output + zero halo
    """
    K = kernel_size
    pad = (K - 1) // 2
    Bt, H, W, kkcin = xp_ref.shape
    ngf = w1_ref.shape[1]
    M = Bt * H * W

    # ---- conv1: one MXU matmul over the folded (kh, kw, cin) contraction -----
    h1 = jnp.dot(xp_ref[...].reshape(M, kkcin), w1_ref[...],
                 preferred_element_type=jnp.float32)
    h1 = jnp.maximum(h1 + b1_ref[...], 0.0)                        # (M, ngf)

    # Stage conv1 output into the padded scratch so conv2 gets SAME padding.
    # Zero only the halo (interior is overwritten right away); a program_id==0
    # gate would be unsafe with a "parallel" batch axis (per-core scratch).
    h1pad_ref[:, pad:pad + H, pad:pad + W, :] = h1.reshape(Bt, H, W, ngf)
    if pad > 0:
        zrow = jnp.zeros((Bt, pad, W + 2 * pad, ngf), jnp.float32)
        h1pad_ref[:, 0:pad, :, :] = zrow
        h1pad_ref[:, pad + H:, :, :] = zrow
        zcol = jnp.zeros((Bt, H + 2 * pad, pad, ngf), jnp.float32)
        h1pad_ref[:, :, 0:pad, :] = zcol
        h1pad_ref[:, :, pad + W:, :] = zcol

    # ---- conv2: taps folded into the contraction -> ONE (M,288)@(288,32) dot -
    taps = [h1pad_ref[:, kh:kh + H, kw:kw + W, :]
            for kh in range(K) for kw in range(K)]                 # 9x (Bt,H,W,ngf)
    lhs2 = jnp.concatenate(taps, axis=-1).reshape(M, K * K * ngf)  # (M, 288)
    h2 = jnp.dot(lhs2, w2_ref[...], preferred_element_type=jnp.float32)
    h2 = jnp.maximum(h2 + b2_ref[...], 0.0)                        # (M, ngf)

    # ---- GAP + Linear fused into one skinny matmul, then sigmoid -------------
    # wls is already scaled by 1/(H*W), so summing v over H*W == GAP @ wl.
    v = jnp.dot(h2, wls_ref[...], preferred_element_type=jnp.float32)  # (M, 1)
    logits = jnp.sum(v.reshape(Bt, H * W, 1), axis=1) + bl_ref[...]    # (Bt, 1)
    out_ref[...] = jax.nn.sigmoid(logits).reshape(1, Bt, 1)


def router_gap_double_conv(x_nchw, params, *, batch_tile=8):
    """Forward pass. x_nchw: (B, Cin, H, W) float32 -> (B,) float32 probs."""
    x = jnp.transpose(x_nchw, (0, 2, 3, 1)).astype(jnp.float32)    # NCHW -> NHWC
    B, H, W, Cin = x.shape
    K = params["w1"].shape[0]
    ngf = params["w1"].shape[-1]
    pad = (K - 1) // 2

    # Batch tile. Keep the grid >= 2 steps when B >= 2 so the "parallel" batch
    # axis can shard across v7x's two TensorCores (grid=(1,) leaves a TC idle).
    Bt = min(batch_tile, B)
    if B >= 2 and -(-B // Bt) < 2:
        Bt = -(-B // 2)
    G = -(-B // Bt)
    Bp = G * Bt
    if Bp != B:
        x = jnp.pad(x, ((0, Bp - B), (0, 0), (0, 0), (0, 0)))

    # conv1 im2col built with cheap XLA ops outside the kernel:
    # (Bp, H, W, K*K*Cin), column order (kh, kw, c) == w1.reshape(K*K*Cin, ngf).
    x_pad = jnp.pad(x, ((0, 0), (pad, pad), (pad, pad), (0, 0)))
    patches = jnp.concatenate(
        [x_pad[:, kh:kh + H, kw:kw + W, :]
         for kh in range(K) for kw in range(K)], axis=-1)

    w1_2d = params["w1"].reshape(K * K * Cin, ngf)
    w2_2d = params["w2"].reshape(K * K * ngf, ngf)
    wl_scaled = (params["wl"][0] * (1.0 / float(H * W))).reshape(ngf, 1)

    Hp, Wp = H + 2 * pad, W + 2 * pad

    out = pl.pallas_call(
        functools.partial(_router_kernel, kernel_size=K),
        out_shape=jax.ShapeDtypeStruct((G, Bt, 1), jnp.float32),
        grid_spec=pltpu.PrefetchScalarGridSpec(
            num_scalar_prefetch=0,
            grid=(G,),
            in_specs=[
                pl.BlockSpec((Bt, H, W, K * K * Cin), lambda i: (i, 0, 0, 0)),
                pl.BlockSpec((K * K * Cin, ngf), lambda i: (0, 0)),
                pl.BlockSpec((1, ngf), lambda i: (0, 0)),
                pl.BlockSpec((K * K * ngf, ngf), lambda i: (0, 0)),
                pl.BlockSpec((1, ngf), lambda i: (0, 0)),
                pl.BlockSpec((ngf, 1), lambda i: (0, 0)),
                pl.BlockSpec((1, 1), lambda i: (0, 0)),
            ],
            # Last two block dims equal the full array dims -> always layout-legal,
            # even when Bt == 1.
            out_specs=pl.BlockSpec((1, Bt, 1), lambda i: (i, 0, 0)),
            scratch_shapes=[
                pltpu.VMEM((Bt, Hp, Wp, ngf), jnp.float32),   # padded conv1 act
            ],
        ),
        compiler_params=pltpu.CompilerParams(
            dimension_semantics=("parallel",),
            vmem_limit_bytes=32 * 1024 * 1024,   # safe on v5e/v6e/v7x; Bt<=8 uses well under 10 MB
        ),
    )(patches, w1_2d, params["b1"], w2_2d, params["b2"], wl_scaled, params["bl"])
    return out.reshape(Bp)[:B]   # matches torch .squeeze(): (B, 1) -> (B,)


def init_params(key, input_nc, ngf=32, kernel_size=3):
    """Deterministic synthetic init (uniform, fan-in scaled, like torch defaults)."""
    k1, k2, k3, k4, k5, k6 = jax.random.split(key, 6)
    fan1 = input_nc * kernel_size * kernel_size
    fan2 = ngf * kernel_size * kernel_size

    def u(k, shape, fan):
        bound = 1.0 / jnp.sqrt(jnp.float32(fan))
        return jax.random.uniform(k, shape, jnp.float32, -bound, bound)

    return dict(
        w1=u(k1, (kernel_size, kernel_size, input_nc, ngf), fan1),
        b1=u(k2, (1, ngf), fan1),
        w2=u(k3, (kernel_size, kernel_size, ngf, ngf), fan2),
        b2=u(k4, (1, ngf), fan2),
        wl=u(k5, (1, ngf), ngf),
        bl=u(k6, (1, 1), ngf),
    )


def reference_forward(x_nchw, params):
    """Pure-JAX reference of the PyTorch forward (soft_decision=True)."""
    x = jnp.transpose(x_nchw, (0, 2, 3, 1)).astype(jnp.float32)
    dn = ("NHWC", "HWIO", "NHWC")
    h = jax.lax.conv_general_dilated(x, params["w1"], (1, 1), "SAME",
                                     dimension_numbers=dn)
    h = jax.nn.relu(h + params["b1"][0])
    h = jax.lax.conv_general_dilated(h, params["w2"], (1, 1), "SAME",
                                     dimension_numbers=dn)
    h = jax.nn.relu(h + params["b2"][0])
    gap = h.mean(axis=(1, 2))                                  # (B, ngf)
    logits = gap @ params["wl"][0] + params["bl"][0, 0]        # (B,)
    return jax.nn.sigmoid(logits)


if __name__ == "__main__":
    B, Cin, H, W = 2, 4, 16, 16
    ngf = 32

    key = jax.random.PRNGKey(0)
    kx, kp = jax.random.split(key)
    x = jax.random.normal(kx, (B, Cin, H, W), jnp.float32)     # NCHW like torch
    params = init_params(kp, input_nc=Cin, ngf=ngf, kernel_size=3)

    out = jax.block_until_ready(router_gap_double_conv(x, params))
    ref = jax.block_until_ready(reference_forward(x, params))

    assert out.shape == (B,), f"bad output shape {out.shape}"
    assert jnp.allclose(out, ref, atol=1e-4, rtol=1e-4), (
        f"mismatch: kernel={out}, ref={ref}")
    print("KERNEL_OK")
</pallas_src>

<mosaic_0001>
module attributes {stable_mosaic.version = 11 : i64} {
  func.func @_router_kernel(%arg0: i32, %arg1: memref<1x16x16x36xf32, #tpu.memory_space<vmem>>, %arg2: memref<36x32xf32, #tpu.memory_space<vmem>>, %arg3: memref<1x32xf32, #tpu.memory_space<vmem>>, %arg4: memref<288x32xf32, #tpu.memory_space<vmem>>, %arg5: memref<1x32xf32, #tpu.memory_space<vmem>>, %arg6: memref<32x1xf32, #tpu.memory_space<vmem>>, %arg7: memref<1x1xf32, #tpu.memory_space<vmem>>, %arg8: memref<1x1x1xf32, #tpu.memory_space<vmem>>, %arg9: memref<1x18x18x32xf32, #tpu.memory_space<vmem>>) attributes {dimension_semantics = [#tpu.dimension_semantics<parallel>], iteration_bounds = array<i64: 2>, scalar_prefetch = 0 : i64, scratch_operands = 1 : i64, tpu.core_type = #tpu.core_type<tc>, window_params = [{transform_indices = @transform_0, window_bounds = array<i64: 1, 16, 16, 36>}, {pipeline_mode = #tpu.pipeline_mode<synchronous>, transform_indices = @transform_1, window_bounds = array<i64: 36, 32>}, {pipeline_mode = #tpu.pipeline_mode<synchronous>, transform_indices = @transform_2, window_bounds = array<i64: 1, 32>}, {pipeline_mode = #tpu.pipeline_mode<synchronous>, transform_indices = @transform_3, window_bounds = array<i64: 288, 32>}, {pipeline_mode = #tpu.pipeline_mode<synchronous>, transform_indices = @transform_4, window_bounds = array<i64: 1, 32>}, {pipeline_mode = #tpu.pipeline_mode<synchronous>, transform_indices = @transform_5, window_bounds = array<i64: 32, 1>}, {pipeline_mode = #tpu.pipeline_mode<synchronous>, transform_indices = @transform_6, window_bounds = array<i64: 1, 1>}, {transform_indices = @transform_7, window_bounds = array<i64: 1, 1, 1>}]} {
    %c0 = arith.constant 0 : index
    %c0_0 = arith.constant 0 : index
    %c0_1 = arith.constant 0 : index
    %c0_2 = arith.constant 0 : index
    %0 = vector.load %arg1[%c0, %c0_0, %c0_1, %c0_2] : memref<1x16x16x36xf32, #tpu.memory_space<vmem>>, vector<1x16x16x36xf32>
    %1 = vector.shape_cast %0 : vector<1x16x16x36xf32> to vector<256x36xf32>
    %c0_3 = arith.constant 0 : index
    %c0_4 = arith.constant 0 : index
    %2 = vector.load %arg2[%c0_3, %c0_4] : memref<36x32xf32, #tpu.memory_space<vmem>>, vector<36x32xf32>
    %cst = arith.constant dense<0.000000e+00> : vector<256x32xf32>
    %3 = tpu.matmul %1, %2, %cst {dimension_numbers = #tpu.dot_dimension_numbers<[1], [0], [0], [1], [0, 0, 1, 1], [], []>} : vector<256x36xf32>, vector<36x32xf32>, vector<256x32xf32> -> vector<256x32xf32>
    %c0_5 = arith.constant 0 : index
    %c0_6 = arith.constant 0 : index
    %4 = vector.load %arg3[%c0_5, %c0_6] : memref<1x32xf32, #tpu.memory_space<vmem>>, vector<1x32xf32>
    %5 = vector.broadcast %4 : vector<1x32xf32> to vector<256x32xf32>
    %6 = arith.addf %3, %5 : vector<256x32xf32>
    %cst_7 = arith.constant 0.000000e+00 : f32
    %7 = vector.broadcast %cst_7 : f32 to vector<256x32xf32>
    %8 = arith.maximumf %6, %7 : vector<256x32xf32>
    %9 = vector.shape_cast %8 : vector<256x32xf32> to vector<1x16x16x32xf32>
    %c0_8 = arith.constant 0 : index
    %c1 = arith.constant 1 : index
    %c1_9 = arith.constant 1 : index
    %c0_10 = arith.constant 0 : index
    %10 = vector.load %arg9[%c0_8, %c1, %c1_9, %c0_10] : memref<1x18x18x32xf32, #tpu.memory_space<vmem>>, vector<1x16x16x32xf32>
    tpu.vector_store %arg9[%c0_8, %c1, %c1_9, %c0_10], %9 {strides = array<i32>} : memref<1x18x18x32xf32, #tpu.memory_space<vmem>>, vector<1x16x16x32xf32>,
    %cst_11 = arith.constant 0.000000e+00 : f32
    %11 = vector.broadcast %cst_11 : f32 to vector<1x1x18x32xf32>
    %c0_12 = arith.constant 0 : index
    %c0_13 = arith.constant 0 : index
    %c0_14 = arith.constant 0 : index
    %c0_15 = arith.constant 0 : index
    %12 = vector.load %arg9[%c0_12, %c0_13, %c0_14, %c0_15] : memref<1x18x18x32xf32, #tpu.memory_space<vmem>>, vector<1x1x18x32xf32>
    tpu.vector_store %arg9[%c0_12, %c0_13, %c0_14, %c0_15], %11 {strides = array<i32>} : memref<1x18x18x32xf32, #tpu.memory_space<vmem>>, vector<1x1x18x32xf32>,
    %c0_16 = arith.constant 0 : index
    %c17 = arith.constant 17 : index
    %c0_17 = arith.constant 0 : index
    %c0_18 = arith.constant 0 : index
    %13 = vector.load %arg9[%c0_16, %c17, %c0_17, %c0_18] : memref<1x18x18x32xf32, #tpu.memory_space<vmem>>, vector<1x1x18x32xf32>
    tpu.vector_store %arg9[%c0_16, %c17, %c0_17, %c0_18], %11 {strides = array<i32>} : memref<1x18x18x32xf32, #tpu.memory_space<vmem>>, vector<1x1x18x32xf32>,
    %cst_19 = arith.constant 0.000000e+00 : f32
    %14 = vector.broadcast %cst_19 : f32 to vector<1x18x1x32xf32>
    %c0_20 = arith.constant 0 : index
    %c0_21 = arith.constant 0 : index
    %c0_22 = arith.constant 0 : index
    %c0_23 = arith.constant 0 : index
    %15 = vector.load %arg9[%c0_20, %c0_21, %c0_22, %c0_23] : memref<1x18x18x32xf32, #tpu.memory_space<vmem>>, vector<1x18x1x32xf32>
    tpu.vector_store %arg9[%c0_20, %c0_21, %c0_22, %c0_23], %14 {strides = array<i32>} : memref<1x18x18x32xf32, #tpu.memory_space<vmem>>, vector<1x18x1x32xf32>,
    %c0_24 = arith.constant 0 : index
    %c0_25 = arith.constant 0 : index
    %c17_26 = arith.constant 17 : index
    %c0_27 = arith.constant 0 : index
    %16 = vector.load %arg9[%c0_24, %c0_25, %c17_26, %c0_27] : memref<1x18x18x32xf32, #tpu.memory_space<vmem>>, vector<1x18x1x32xf32>
    tpu.vector_store %arg9[%c0_24, %c0_25, %c17_26, %c0_27], %14 {strides = array<i32>} : memref<1x18x18x32xf32, #tpu.memory_space<vmem>>, vector<1x18x1x32xf32>,
    %c0_28 = arith.constant 0 : index
    %c0_29 = arith.constant 0 : index
    %c0_30 = arith.constant 0 : index
    %c0_31 = arith.constant 0 : index
    %17 = vector.load %arg9[%c0_28, %c0_29, %c0_30, %c0_31] : memref<1x18x18x32xf32, #tpu.memory_space<vmem>>, vector<1x16x16x32xf32>
    %c0_32 = arith.constant 0 : index
    %c0_33 = arith.constant 0 : index
    %c1_34 = arith.constant 1 : index
    %c0_35 = arith.constant 0 : index
    %18 = vector.load %arg9[%c0_32, %c0_33, %c1_34, %c0_35] : memref<1x18x18x32xf32, #tpu.memory_space<vmem>>, vector<1x16x16x32xf32>
    %c0_36 = arith.constant 0 : index
    %c0_37 = arith.constant 0 : index
    %c2 = arith.constant 2 : index
    %c0_38 = arith.constant 0 : index
    %19 = vector.load %arg9[%c0_36, %c0_37, %c2, %c0_38] : memref<1x18x18x32xf32, #tpu.memory_space<vmem>>, vector<1x16x16x32xf32>
    %c0_39 = arith.constant 0 : index
    %c1_40 = arith.constant 1 : index
    %c0_41 = arith.constant 0 : index
    %c0_42 = arith.constant 0 : index
    %20 = vector.load %arg9[%c0_39, %c1_40, %c0_41, %c0_42] : memref<1x18x18x32xf32, #tpu.memory_space<vmem>>, vector<1x16x16x32xf32>
    %c0_43 = arith.constant 0 : index
    %c1_44 = arith.constant 1 : index
    %c1_45 = arith.constant 1 : index
    %c0_46 = arith.constant 0 : index
    %21 = vector.load %arg9[%c0_43, %c1_44, %c1_45, %c0_46] : memref<1x18x18x32xf32, #tpu.memory_space<vmem>>, vector<1x16x16x32xf32>
    %c0_47 = arith.constant 0 : index
    %c1_48 = arith.constant 1 : index
    %c2_49 = arith.constant 2 : index
    %c0_50 = arith.constant 0 : index
    %22 = vector.load %arg9[%c0_47, %c1_48, %c2_49, %c0_50] : memref<1x18x18x32xf32, #tpu.memory_space<vmem>>, vector<1x16x16x32xf32>
    %c0_51 = arith.constant 0 : index
    %c2_52 = arith.constant 2 : index
    %c0_53 = arith.constant 0 : index
    %c0_54 = arith.constant 0 : index
    %23 = vector.load %arg9[%c0_51, %c2_52, %c0_53, %c0_54] : memref<1x18x18x32xf32, #tpu.memory_space<vmem>>, vector<1x16x16x32xf32>
    %c0_55 = arith.constant 0 : index
    %c2_56 = arith.constant 2 : index
    %c1_57 = arith.constant 1 : index
    %c0_58 = arith.constant 0 : index
    %24 = vector.load %arg9[%c0_55, %c2_56, %c1_57, %c0_58] : memref<1x18x18x32xf32, #tpu.memory_space<vmem>>, vector<1x16x16x32xf32>
    %c0_59 = arith.constant 0 : index
    %c2_60 = arith.constant 2 : index
    %c2_61 = arith.constant 2 : index
    %c0_62 = arith.constant 0 : index
    %25 = vector.load %arg9[%c0_59, %c2_60, %c2_61, %c0_62] : memref<1x18x18x32xf32, #tpu.memory_space<vmem>>, vector<1x16x16x32xf32>
    %26 = tpu.concatenate %17, %18, %19, %20, %21, %22, %23, %24, %25 in 3 : vector<1x16x16x32xf32>, vector<1x16x16x32xf32>, vector<1x16x16x32xf32>, vector<1x16x16x32xf32>, vector<1x16x16x32xf32>, vector<1x16x16x32xf32>, vector<1x16x16x32xf32>, vector<1x16x16x32xf32>, vector<1x16x16x32xf32> -> vector<1x16x16x288xf32>
    %27 = vector.shape_cast %26 : vector<1x16x16x288xf32> to vector<256x288xf32>
    %c0_63 = arith.constant 0 : index
    %c0_64 = arith.constant 0 : index
    %28 = vector.load %arg4[%c0_63, %c0_64] : memref<288x32xf32, #tpu.memory_space<vmem>>, vector<288x32xf32>
    %cst_65 = arith.constant dense<0.000000e+00> : vector<256x32xf32>
    %29 = tpu.matmul %27, %28, %cst_65 {dimension_numbers = #tpu.dot_dimension_numbers<[1], [0], [0], [1], [0, 0, 1, 1], [], []>} : vector<256x288xf32>, vector<288x32xf32>, vector<256x32xf32> -> vector<256x32xf32>
    %c0_66 = arith.constant 0 : index
    %c0_67 = arith.constant 0 : index
    %30 = vector.load %arg5[%c0_66, %c0_67] : memref<1x32xf32, #tpu.memory_space<vmem>>, vector<1x32xf32>
    %31 = vector.broadcast %30 : vector<1x32xf32> to vector<256x32xf32>
    %32 = arith.addf %29, %31 : vector<256x32xf32>
    %cst_68 = arith.constant 0.000000e+00 : f32
    %33 = vector.broadcast %cst_68 : f32 to vector<256x32xf32>
    %34 = arith.maximumf %32, %33 : vector<256x32xf32>
    %c0_69 = arith.constant 0 : index
    %c0_70 = arith.constant 0 : index
    %35 = vector.load %arg6[%c0_69, %c0_70] : memref<32x1xf32, #tpu.memory_space<vmem>>, vector<32x1xf32>
    %cst_71 = arith.constant dense<0.000000e+00> : vector<256x1xf32>
    %36 = tpu.matmul %34, %35, %cst_71 {dimension_numbers = #tpu.dot_dimension_numbers<[1], [0], [0], [1], [0, 0, 1, 1], [], []>} : vector<256x32xf32>, vector<32x1xf32>, vector<256x1xf32> -> vector<256x1xf32>
    %37 = vector.shape_cast %36 : vector<256x1xf32> to vector<1x256x1xf32>
    %cst_72 = arith.constant dense<0.000000e+00> : vector<1x1xf32>
    %38 = vector.multi_reduction <add>, %37, %cst_72 [1] : vector<1x256x1xf32> to vector<1x1xf32>
    %c0_73 = arith.constant 0 : index
    %c0_74 = arith.constant 0 : index
    %39 = vector.load %arg7[%c0_73, %c0_74] : memref<1x1xf32, #tpu.memory_space<vmem>>, vector<1x1xf32>
    %40 = arith.addf %38, %39 : vector<1x1xf32>
    %41 = arith.negf %40 : vector<1x1xf32>
    %42 = math.exp %41 : vector<1x1xf32>
    %cst_75 = arith.constant 1.000000e+00 : f32
    %43 = vector.broadcast %cst_75 : f32 to vector<1x1xf32>
    %44 = arith.addf %43, %42 : vector<1x1xf32>
    %45 = arith.divf %43, %44 : vector<1x1xf32>
    %46 = vector.shape_cast %45 : vector<1x1xf32> to vector<1x1x1xf32>
    %c0_76 = arith.constant 0 : index
    %c0_77 = arith.constant 0 : index
    %c0_78 = arith.constant 0 : index
    %47 = vector.load %arg8[%c0_76, %c0_77, %c0_78] : memref<1x1x1xf32, #tpu.memory_space<vmem>>, vector<1x1x1xf32>
    tpu.vector_store %arg8[%c0_76, %c0_77, %c0_78], %46 {strides = array<i32>} : memref<1x1x1xf32, #tpu.memory_space<vmem>>, vector<1x1x1xf32>,
    return
  }
  func.func @transform_0(%arg0: i32) -> (i32, i32, i32, i32) {
    %c0_i32 = arith.constant 0 : i32
    %c0_i32_0 = arith.constant 0 : i32
    %c0_i32_1 = arith.constant 0 : i32
    %c0_i32_2 = arith.constant 0 : i32
    return %arg0, %c0_i32, %c0_i32_0, %c0_i32_1 : i32, i32, i32, i32
  }
  func.func @transform_1(%arg0: i32) -> (i32, i32) {
    %c0_i32 = arith.constant 0 : i32
    %c0_i32_0 = arith.constant 0 : i32
    %c0_i32_1 = arith.constant 0 : i32
    return %c0_i32, %c0_i32_0 : i32, i32
  }
  func.func @transform_2(%arg0: i32) -> (i32, i32) {
    %c0_i32 = arith.constant 0 : i32
    %c0_i32_0 = arith.constant 0 : i32
    %c0_i32_1 = arith.constant 0 : i32
    return %c0_i32, %c0_i32_0 : i32, i32
  }
  func.func @transform_3(%arg0: i32) -> (i32, i32) {
    %c0_i32 = arith.constant 0 : i32
    %c0_i32_0 = arith.constant 0 : i32
    %c0_i32_1 = arith.constant 0 : i32
    return %c0_i32, %c0_i32_0 : i32, i32
  }
  func.func @transform_4(%arg0: i32) -> (i32, i32) {
    %c0_i32 = arith.constant 0 : i32
    %c0_i32_0 = arith.constant 0 : i32
    %c0_i32_1 = arith.constant 0 : i32
    return %c0_i32, %c0_i32_0 : i32, i32
  }
  func.func @transform_5(%arg0: i32) -> (i32, i32) {
    %c0_i32 = arith.constant 0 : i32
    %c0_i32_0 = arith.constant 0 : i32
    %c0_i32_1 = arith.constant 0 : i32
    return %c0_i32, %c0_i32_0 : i32, i32
  }
  func.func @transform_6(%arg0: i32) -> (i32, i32) {
    %c0_i32 = arith.constant 0 : i32
    %c0_i32_0 = arith.constant 0 : i32
    %c0_i32_1 = arith.constant 0 : i32
    return %c0_i32, %c0_i32_0 : i32, i32
  }
  func.func @transform_7(%arg0: i32) -> (i32, i32, i32) {
    %c0_i32 = arith.constant 0 : i32
    %c0_i32_0 = arith.constant 0 : i32
    %c0_i32_1 = arith.constant 0 : i32
    return %arg0, %c0_i32, %c0_i32_0 : i32, i32, i32
  }
}

</mosaic_0001>

<llo_original>
// kernel: tpu_custom_call.1
$region0: #{tpu_custom_call.1}
  #allocation0 [shape = 'u32[]', space=smem, size = 0x4, offset = 0x4, fixed_abs, tag = 'smem constant byte address 0x4 - core index']
  #allocation1 [shape = 'u32[144,128]{1,0:T(1,128)}', space=vmem, size = 0x12000, scoped, tag = 'internal scratch']
  #allocation2 [shape = 'f32[1,18,18,32]{3,2,1,0:T(8,128)}', space=vmem, size = 0x36000, scoped, tag = 'scratch operand']
  #allocation3 [shape = 'f32[1,1]{1,0:T(1,128)S(1)}', space=vmem, size = 0x200, scoped, tag = 'scoped memory for tpu_custom_call.1']
  %s0 = inlined_call_operand.hbm [shape: f32[2,16,16,36], index: 0, kind: input, shape index: {}]
  %s1 = inlined_call_operand.vmem [shape: f32[36,32], index: 1, kind: input, shape index: {}]
  %s2 = inlined_call_operand.vmem [shape: f32[1,32], index: 2, kind: input, shape index: {}]
  %s3 = inlined_call_operand.vmem [shape: f32[288,32], index: 3, kind: input, shape index: {}]
  %s4 = inlined_call_operand.vmem [shape: f32[1,32], index: 4, kind: input, shape index: {}]
  %s5 = inlined_call_operand.vmem [shape: f32[32,1], index: 5, kind: input, shape index: {}]
  %s6 = inlined_call_operand.<no memory space> [shape: f32[1,1], index: 6, kind: input, shape index: {}]
  %s7 = inlined_call_operand.vmem [shape: f32[2,1,1], index: 7, kind: output, shape index: {}]
  %s8 = sld [smem:[#allocation0]]
  $region65: #{tpu_custom_call.1} parent=0
    _
  %s10 = ssub.s32 1, %s8
  %s11 = scalar_select 0, %s10, %s8
  %v12 = vstv %s6
  %13 = vst [vmem:[#allocation3] sm:$0x1] %v12
  $region1: #{tpu_custom_call.1} parent=0
    #allocation4 [shape = 'u8[262144]{0}', space=vmem, size = 0x40000, scoped, tag = 'input window, operand 0']
    #allocation5 [shape = 's32[2]{0}', space=sflag, size = 0x8, scoped, tag = 'scoped memory for tpu_custom_call.1']
    %14 = vsyncpa [#allocation5], 0
    %s15 = scalar_lea.sflag [#allocation5], 1
    %16 = vsyncpa %s15, 0
    loop: start=0, step=1, limit=4
    $region2: #{tpu_custom_call.1} parent=1 // loop_pre_header
      _
    $region3: #{tpu_custom_call.1} parent=1 // loop_header
      %s18 = sphi 0, %s22
      %p19 = scmp.ge.s32.totalorder %s18, 4
      %s28 = sphi 0, %s30
      %s31 = sphi 0, %s28
      %s32 = sphi 0, %s31
      %s48 = sphi 0, %s32
      %s52 = sphi 0, %s52
      %s54 = sphi 0, %s52
      %s55 = sphi 0, %s54
      %s69 = sphi 0, %s55
      %s73 = sphi 0, %s73
      %s75 = sphi 0, %s73
      %s76 = sphi 0, %s75
      %s90 = sphi 0, %s76
      %s94 = sphi 0, %s94
      %s96 = sphi 0, %s94
      %s97 = sphi 0, %s96
      %s111 = sphi 0, %s97
      %s115 = sphi 0, %s115
      %s117 = sphi 0, %s115
      %s118 = sphi 0, %s117
      %s132 = sphi 0, %s118
      %s136 = sphi 0, %s136
      %s138 = sphi 0, %s136
      %s139 = sphi 0, %s138
      %s153 = sphi 0, %s139
      %s157 = sphi 0, %s157
      %s159 = sphi 0, %s157
      %s160 = sphi 0, %s159
      %s174 = sphi 0, %s160
      %s180 = sphi 0, %s182
      %s183 = sphi 0, %s180
      %s184 = sphi 0, %s183
      %s200 = sphi 0, %s184
    $region4: #{tpu_custom_call.1} parent=1 // loop_header_branch
      %21 = sbr.rel (%p19) target = $region8
    $region5: #{tpu_custom_call.1} parent=1 // loop_body
      %s23 = ssub.s32 %s18, 1
      %s24 = ssub.s32 %s18, 2
      %s25 = sadd.s32 %s18, 1
      %s26 = ssub.s32 %s18, %s25
      %p27 = scmp.eq.s32.totalorder %s26, 0
      %s29 = sadd.s32 %s28, 1
      %s30 = scalar_select %p27, %s28, %s29
      %p33 = pneg %p27
      %p34 = scmp.eq.s32.totalorder %s18, 1
      %p35 = por %p33, %p34
      %p36 = scmp.ne.s32.totalorder %s28, %s31
      %p37 = scmp.eq.s32.totalorder %s18, 0
      %p38 = por %p36, %p37
      %p39 = scmp.ne.s32.totalorder %s28, %s31
      %p40 = scmp.eq.s32.totalorder %s23, 1
      %p41 = por %p39, %p40
      %p42 = scmp.ne.s32.totalorder %s31, %s32
      %p43 = scmp.eq.s32.totalorder %s23, 0
      %p44 = por %p42, %p43
      %p45 = scmp.ne.s32.totalorder %s31, %s32
      %p46 = scmp.eq.s32.totalorder %s24, 1
      %p47 = por %p45, %p46
      %p49 = scmp.ne.s32.totalorder %s32, %s48
      %p50 = scmp.eq.s32.totalorder %s24, 0
      %p51 = por %p49, %p50
      %s53 = sadd.s32 %s52, 1
      %p56 = scmp.eq.s32.totalorder %s18, 1
      %p57 = scmp.ne.s32.totalorder %s52, %s54
      %p58 = scmp.eq.s32.totalorder %s18, 0
      %p59 = por %p57, %p58
      %p60 = scmp.ne.s32.totalorder %s52, %s54
      %p61 = scmp.eq.s32.totalorder %s23, 1
      %p62 = por %p60, %p61
      %p63 = scmp.ne.s32.totalorder %s54, %s55
      %p64 = scmp.eq.s32.totalorder %s23, 0
      %p65 = por %p63, %p64
      %p66 = scmp.ne.s32.totalorder %s54, %s55
      %p67 = scmp.eq.s32.totalorder %s24, 1
      %p68 = por %p66, %p67
      %p70 = scmp.ne.s32.totalorder %s55, %s69
      %p71 = scmp.eq.s32.totalorder %s24, 0
      %p72 = por %p70, %p71
      %s74 = sadd.s32 %s73, 1
      %p77 = scmp.eq.s32.totalorder %s18, 1
      %p78 = scmp.ne.s32.totalorder %s73, %s75
      %p79 = scmp.eq.s32.totalorder %s18, 0
      %p80 = por %p78, %p79
      %p81 = scmp.ne.s32.totalorder %s73, %s75
      %p82 = scmp.eq.s32.totalorder %s23, 1
      %p83 = por %p81, %p82
      %p84 = scmp.ne.s32.totalorder %s75, %s76
      %p85 = scmp.eq.s32.totalorder %s23, 0
      %p86 = por %p84, %p85
      %p87 = scmp.ne.s32.totalorder %s75, %s76
      %p88 = scmp.eq.s32.totalorder %s24, 1
      %p89 = por %p87, %p88
      %p91 = scmp.ne.s32.totalorder %s76, %s90
      %p92 = scmp.eq.s32.totalorder %s24, 0
      %p93 = por %p91, %p92
      %s95 = sadd.s32 %s94, 1
      %p98 = scmp.eq.s32.totalorder %s18, 1
      %p99 = scmp.ne.s32.totalorder %s94, %s96
      %p100 = scmp.eq.s32.totalorder %s18, 0
      %p101 = por %p99, %p100
      %p102 = scmp.ne.s32.totalorder %s94, %s96
      %p103 = scmp.eq.s32.totalorder %s23, 1
      %p104 = por %p102, %p103
      %p105 = scmp.ne.s32.totalorder %s96, %s97
      %p106 = scmp.eq.s32.totalorder %s23, 0
      %p107 = por %p105, %p106
      %p108 = scmp.ne.s32.totalorder %s96, %s97
      %p109 = scmp.eq.s32.totalorder %s24, 1
      %p110 = por %p108, %p109
      %p112 = scmp.ne.s32.totalorder %s97, %s111
      %p113 = scmp.eq.s32.totalorder %s24, 0
      %p114 = por %p112, %p113
      %s116 = sadd.s32 %s115, 1
      %p119 = scmp.eq.s32.totalorder %s18, 1
      %p120 = scmp.ne.s32.totalorder %s115, %s117
      %p121 = scmp.eq.s32.totalorder %s18, 0
      %p122 = por %p120, %p121
      %p123 = scmp.ne.s32.totalorder %s115, %s117
      %p124 = scmp.eq.s32.totalorder %s23, 1
      %p125 = por %p123, %p124
      %p126 = scmp.ne.s32.totalorder %s117, %s118
      %p127 = scmp.eq.s32.totalorder %s23, 0
      %p128 = por %p126, %p127
      %p129 = scmp.ne.s32.totalorder %s117, %s118
      %p130 = scmp.eq.s32.totalorder %s24, 1
      %p131 = por %p129, %p130
      %p133 = scmp.ne.s32.totalorder %s118, %s132
      %p134 = scmp.eq.s32.totalorder %s24, 0
      %p135 = por %p133, %p134
      %s137 = sadd.s32 %s136, 1
      %p140 = scmp.eq.s32.totalorder %s18, 1
      %p141 = scmp.ne.s32.totalorder %s136, %s138
      %p142 = scmp.eq.s32.totalorder %s18, 0
      %p143 = por %p141, %p142
      %p144 = scmp.ne.s32.totalorder %s136, %s138
      %p145 = scmp.eq.s32.totalorder %s23, 1
      %p146 = por %p144, %p145
      %p147 = scmp.ne.s32.totalorder %s138, %s139
      %p148 = scmp.eq.s32.totalorder %s23, 0
      %p149 = por %p147, %p148
      %p150 = scmp.ne.s32.totalorder %s138, %s139
      %p151 = scmp.eq.s32.totalorder %s24, 1
      %p152 = por %p150, %p151
      %p154 = scmp.ne.s32.totalorder %s139, %s153
      %p155 = scmp.eq.s32.totalorder %s24, 0
      %p156 = por %p154, %p155
      %s158 = sadd.s32 %s157, 1
      %p161 = scmp.eq.s32.totalorder %s18, 1
      %p162 = scmp.ne.s32.totalorder %s157, %s159
      %p163 = scmp.eq.s32.totalorder %s18, 0
      %p164 = por %p162, %p163
      %p165 = scmp.ne.s32.totalorder %s157, %s159
      %p166 = scmp.eq.s32.totalorder %s23, 1
      %p167 = por %p165, %p166
      %p168 = scmp.ne.s32.totalorder %s159, %s160
      %p169 = scmp.eq.s32.totalorder %s23, 0
      %p170 = por %p168, %p169
      %p171 = scmp.ne.s32.totalorder %s159, %s160
      %p172 = scmp.eq.s32.totalorder %s24, 1
      %p173 = por %p171, %p172
      %p175 = scmp.ne.s32.totalorder %s160, %s174
      %p176 = scmp.eq.s32.totalorder %s24, 0
      %p177 = por %p175, %p176
      %s178 = ssub.s32 %s18, %s25
      %p179 = scmp.eq.s32.totalorder %s178, 0
      %s181 = sadd.s32 %s180, 1
      %s182 = scalar_select %p179, %s180, %s181
      %p185 = pneg %p179
      %p186 = scmp.eq.s32.totalorder %s18, 1
      %p187 = por %p185, %p186
      %p188 = scmp.ne.s32.totalorder %s180, %s183
      %p189 = scmp.eq.s32.totalorder %s18, 0
      %p190 = por %p188, %p189
      %p191 = scmp.ne.s32.totalorder %s180, %s183
      %p192 = scmp.eq.s32.totalorder %s23, 1
      %p193 = por %p191, %p192
      %p194 = scmp.ne.s32.totalorder %s183, %s184
      %p195 = scmp.eq.s32.totalorder %s23, 0
      %p196 = por %p194, %p195
      %p197 = scmp.ne.s32.totalorder %s183, %s184
      %p198 = scmp.eq.s32.totalorder %s24, 1
      %p199 = por %p197, %p198
      %p201 = scmp.ne.s32.totalorder %s184, %s200
      %p202 = scmp.eq.s32.totalorder %s24, 0
      %p203 = por %p201, %p202
      %p204 = scmp.le.s32.totalorder 1, %s18
      %p205 = scmp.lt.s32.totalorder %s18, 3
      %p206 = pnand %p204, %p205
      %p207 = pneg %p206
      // Predicated region
      $region9: #{tpu_custom_call.1} parent=5 // pred_check
        _
      $region10: #{tpu_custom_call.1} parent=5 // pred_check_branch
        %209 = sbr.rel (%p206) target = $region12
      $region11: #{tpu_custom_call.1} parent=5 // pred_region
        %s210 = ssub.s32 %s18, 1
        // Predicated region
        $region13: #{tpu_custom_call.1} parent=11 // pred_check
          %p211 = pneg %p65
        $region14: #{tpu_custom_call.1} parent=11 // pred_check_branch
          %213 = sbr.rel (%p211) target = $region16
        $region15: #{tpu_custom_call.1} parent=11 // pred_region
          _
        $region16: #{tpu_custom_call.1} parent=11 // pred_fallthru
          _
        // Predicated region
        $region17: #{tpu_custom_call.1} parent=11 // pred_check
          %p214 = pneg %p86
        $region18: #{tpu_custom_call.1} parent=11 // pred_check_branch
          %216 = sbr.rel (%p214) target = $region20
        $region19: #{tpu_custom_call.1} parent=11 // pred_region
          _
        $region20: #{tpu_custom_call.1} parent=11 // pred_fallthru
          _
        // Predicated region
        $region21: #{tpu_custom_call.1} parent=11 // pred_check
          %p217 = pneg %p107
        $region22: #{tpu_custom_call.1} parent=11 // pred_check_branch
          %219 = sbr.rel (%p217) target = $region24
        $region23: #{tpu_custom_call.1} parent=11 // pred_region
          _
        $region24: #{tpu_custom_call.1} parent=11 // pred_fallthru
          _
        // Predicated region
        $region25: #{tpu_custom_call.1} parent=11 // pred_check
          %p220 = pneg %p128
        $region26: #{tpu_custom_call.1} parent=11 // pred_check_branch
          %222 = sbr.rel (%p220) target = $region28
        $region27: #{tpu_custom_call.1} parent=11 // pred_region
          _
        $region28: #{tpu_custom_call.1} parent=11 // pred_fallthru
          _
        // Predicated region
        $region29: #{tpu_custom_call.1} parent=11 // pred_check
          %p223 = pneg %p149
        $region30: #{tpu_custom_call.1} parent=11 // pred_check_branch
          %225 = sbr.rel (%p223) target = $region32
        $region31: #{tpu_custom_call.1} parent=11 // pred_region
          _
        $region32: #{tpu_custom_call.1} parent=11 // pred_fallthru
          _
        // Predicated region
        $region33: #{tpu_custom_call.1} parent=11 // pred_check
          %p226 = pneg %p170
        $region34: #{tpu_custom_call.1} parent=11 // pred_check_branch
          %228 = sbr.rel (%p226) target = $region36
        $region35: #{tpu_custom_call.1} parent=11 // pred_region
          _
        $region36: #{tpu_custom_call.1} parent=11 // pred_fallthru
          _
      $region12: #{tpu_custom_call.1} parent=5 // pred_fallthru
        _
      %p229 = scmp.lt.s32.totalorder %s18, 2
      // Predicated region
      $region37: #{tpu_custom_call.1} parent=5 // pred_check
        %p230 = pneg %p229
      $region38: #{tpu_custom_call.1} parent=5 // pred_check_branch
        %232 = sbr.rel (%p230) target = $region40
      $region39: #{tpu_custom_call.1} parent=5 // pred_region
        // Predicated region
        $region41: #{tpu_custom_call.1} parent=39 // pred_check
          %p233 = pneg %p38
        $region42: #{tpu_custom_call.1} parent=39 // pred_check_branch
          %235 = sbr.rel (%p233) target = $region44
        $region43: #{tpu_custom_call.1} parent=39 // pred_region
          %s236 = sand.u32 %s28, 1
          %s237 = scalar_lea.sflag [#allocation5], %s236
          %s238 = sand.u32 %s28, 1
          %s239 = smul.addr %s238, 256
          %s240 = scalar_lea.vmem [#allocation4], %s239
          %s242 = ssub.s32 4096, 4096
          %243 = vsyncadd %s237, %s242
          %s244 = smul.addr %s18, 32
          %s245 = smul.addr %s244, 128
          %s246 = scalar_lea.hbm %s0, %s245
          %s247 = sshll.u32 %s240, 4
          %s248 = int_to_ptr.vmem [resolvable:$true] %s247
          %253 = dma.hbm_to_vmem [thread:$0]  %s246, 4096, %s248, %s237, 128, 128, 8
        $region44: #{tpu_custom_call.1} parent=39 // pred_fallthru
          _
      $region40: #{tpu_custom_call.1} parent=5 // pred_fallthru
        _
      %p254 = scmp.le.s32.totalorder 1, %s18
      %p255 = scmp.lt.s32.totalorder %s18, 3
      %p256 = pnand %p254, %p255
      %p257 = pneg %p256
      // Predicated region
      $region45: #{tpu_custom_call.1} parent=5 // pred_check
        _
      $region46: #{tpu_custom_call.1} parent=5 // pred_check_branch
        %259 = sbr.rel (%p256) target = $region48
      $region47: #{tpu_custom_call.1} parent=5 // pred_region
        %s260 = ssub.s32 %s18, 1
        %s261 = sand.u32 %s31, 1
        %s262 = scalar_lea.sflag [#allocation5], %s261
        %s263 = sand.u32 %s31, 1
        %s264 = smul.addr %s263, 256
        %s265 = scalar_lea.vmem [#allocation4], %s264
        // Predicated region
        $region49: #{tpu_custom_call.1} parent=47 // pred_check
          %p266 = pneg %p44
        $region50: #{tpu_custom_call.1} parent=47 // pred_check_branch
          %268 = sbr.rel (%p266) target = $region52
        $region51: #{tpu_custom_call.1} parent=47 // pred_region
          %269 = dma.done %s262, 4096
        $region52: #{tpu_custom_call.1} parent=47 // pred_fallthru
          _
        %s270 = sand.u32 %s31, 1
        %s271 = scalar_lea.sflag [#allocation5], %s270
        %s272 = sand.u32 %s31, 1
        %s273 = smul.addr %s272, 256
        %s274 = scalar_lea.vmem [#allocation4], %s273
        %p275 = pneg %p44
        %p276 = pneg %p41
        %p277 = pneg %p65
        %p278 = pneg %p62
        %p279 = pneg %p86
        %p280 = pneg %p83
        %p281 = pneg %p107
        %p282 = pneg %p104
        %p283 = pneg %p128
        %p284 = pneg %p125
        %p285 = pneg %p149
        %p286 = pneg %p146
        %p287 = pneg %p170
        %p288 = pneg %p167
        %p289 = pneg %p196
        %p290 = pneg %p193
        %p291 = scmp.lt.s32.totalorder %s23, 1
        %s292 = scalar_select %p291, %s23, 1
        %s293 = scalar_lea.vmem %s7, %s292
        %p294 = scmp.lt.s32.totalorder %s23, 1
        %s295 = scalar_select %p294, %s23, 1
        %s296 = scalar_lea.vmem %s7, %s295
        %v297 = vld [vmem:[%s265] sm:$0xff]
        %v298 = vld [vmem:[%s265 + $0x8] sm:$0xff]
        %v299 = vld [vmem:[%s265 + $0x10] sm:$0xff]
        %v300 = vld [vmem:[%s265 + $0x18] sm:$0xff]
        %v301 = vld [vmem:[%s265 + $0x20] sm:$0xff]
        %v302 = vld [vmem:[%s265 + $0x28] sm:$0xff]
        %v303 = vld [vmem:[%s265 + $0x30] sm:$0xff]
        %v304 = vld [vmem:[%s265 + $0x38] sm:$0xff]
        %v305 = vld [vmem:[%s265 + $0x40] sm:$0xff]
        %v306 = vld [vmem:[%s265 + $0x48] sm:$0xff]
        %v307 = vld [vmem:[%s265 + $0x50] sm:$0xff]
        %v308 = vld [vmem:[%s265 + $0x58] sm:$0xff]
        %v309 = vld [vmem:[%s265 + $0x60] sm:$0xff]
        %v310 = vld [vmem:[%s265 + $0x68] sm:$0xff]
        %v311 = vld [vmem:[%s265 + $0x70] sm:$0xff]
        %v312 = vld [vmem:[%s265 + $0x78] sm:$0xff]
        %v313 = vld [vmem:[%s265 + $0x80] sm:$0xff]
        %v314 = vld [vmem:[%s265 + $0x88] sm:$0xff]
        %v315 = vld [vmem:[%s265 + $0x90] sm:$0xff]
        %v316 = vld [vmem:[%s265 + $0x98] sm:$0xff]
        %v317 = vld [vmem:[%s265 + $0xa0] sm:$0xff]
        %v318 = vld [vmem:[%s265 + $0xa8] sm:$0xff]
        %v319 = vld [vmem:[%s265 + $0xb0] sm:$0xff]
        %v320 = vld [vmem:[%s265 + $0xb8] sm:$0xff]
        %v321 = vld [vmem:[%s265 + $0xc0] sm:$0xff]
        %v322 = vld [vmem:[%s265 + $0xc8] sm:$0xff]
        %v323 = vld [vmem:[%s265 + $0xd0] sm:$0xff]
        %v324 = vld [vmem:[%s265 + $0xd8] sm:$0xff]
        %v325 = vld [vmem:[%s265 + $0xe0] sm:$0xff]
        %v326 = vld [vmem:[%s265 + $0xe8] sm:$0xff]
        %v327 = vld [vmem:[%s265 + $0xf0] sm:$0xff]
        %v328 = vld [vmem:[%s265 + $0xf8] sm:$0xff]
        %v329 = vld [vmem:[%s1] sm:$0xff]
        %v330 = vld [vmem:[%s1 + $0x8] sm:$0xff]
        %v331 = vld [vmem:[%s1 + $0x10] sm:$0xff]
        %v332 = vld [vmem:[%s1 + $0x18] sm:$0xff]
        %v333 = vld [vmem:[%s1 + $0x20] sm:$0xf]
        %v334 = vld [vmem:[%s2] sm:$0x1]
        %v336 = vlaneseq
        %v337 = vshrl.u32 %v336, 7
        %v338 = vsub.s32 0, %v337
        %v339 = vrot.slane %v334, %v338
        %vm341 = vcmask 293888
        %v343 = vsel %vm341, %v297, 0
        %v346 = vsel %vm341, %v298, 0
        %v349 = vsel %vm341, %v299, 0
        %v352 = vsel %vm341, %v300, 0
        %v355 = vsel %vm341, %v301, 0
        %v358 = vsel %vm341, %v302, 0
        %v361 = vsel %vm341, %v303, 0
        %v364 = vsel %vm341, %v304, 0
        %v367 = vsel %vm341, %v305, 0
        %v370 = vsel %vm341, %v306, 0
        %v373 = vsel %vm341, %v307, 0
        %v376 = vsel %vm341, %v308, 0
        %v379 = vsel %vm341, %v309, 0
        %v382 = vsel %vm341, %v310, 0
        %v385 = vsel %vm341, %v311, 0
        %v388 = vsel %vm341, %v312, 0
        %v391 = vsel %vm341, %v313, 0
        %v394 = vsel %vm341, %v314, 0
        %v397 = vsel %vm341, %v315, 0
        %v400 = vsel %vm341, %v316, 0
        %v403 = vsel %vm341, %v317, 0
        %v406 = vsel %vm341, %v318, 0
        %v409 = vsel %vm341, %v319, 0
        %v412 = vsel %vm341, %v320, 0
        %v415 = vsel %vm341, %v321, 0
        %v418 = vsel %vm341, %v322, 0
        %v421 = vsel %vm341, %v323, 0
        %v424 = vsel %vm341, %v324, 0
        %v427 = vsel %vm341, %v325, 0
        %v430 = vsel %vm341, %v326, 0
        %v433 = vsel %vm341, %v327, 0
        %v436 = vsel %vm341, %v328, 0
        %vm438 = vcmask 1043456
        %v440 = vsel %vm438, %v333, 0
        %442 = vmatprep.subr.mxu0 0.0
        %443 = vmatpush1.msra.mxu0 %v329
        %444 = vmatprep.subr.mxu0 0.0
        %445 = vmatpush1.msra.mxu0 %v330
        %446 = vmatprep.subr.mxu0 0.0
        %447 = vmatpush1.msra.mxu0 %v331
        %448 = vmatprep.subr.mxu0 0.0
        %449 = vmatpush1.msra.mxu0 %v332
        %450 = vmatprep.subr.mxu0 0.0
        %451 = vmatpush1.msra.mxu0 %v440
        %452 = vmatprep.subr.mxu0 0.0
        %453 = vmatpush1.msra.mxu0 0.0
        %454 = vmatprep.subr.mxu0 0.0
        %455 = vmatpush1.msra.mxu0 0.0
        %456 = vmatprep.subr.mxu0 0.0
        %457 = vmatpush1.msra.mxu0 0.0
        %458 = vmatprep.subr.mxu0 0.0
        %459 = vmatpush1.msra.mxu0 0.0
        %460 = vmatprep.subr.mxu0 0.0
        %461 = vmatpush1.msra.mxu0 0.0
        %462 = vmatprep.subr.mxu0 0.0
        %463 = vmatpush1.msra.mxu0 0.0
        %464 = vmatprep.subr.mxu0 0.0
        %465 = vmatpush1.msra.mxu0 0.0
        %466 = vmatprep.subr.mxu0 0.0
        %467 = vmatpush1.msra.mxu0 0.0
        %468 = vmatprep.subr.mxu0 0.0
        %469 = vmatpush1.msra.mxu0 0.0
        %470 = vmatprep.subr.mxu0 0.0
        %471 = vmatpush1.msra.mxu0 0.0
        %472 = vmatprep.subr.mxu0 0.0
        %473 = vmatpush1.msra.mxu0 0.0
        %474 = vmatprep.subr.mxu0 0.0
        %475 = vmatpush1.msra.mxu0 0.0
        %476 = vmatprep.subr.mxu0 0.0
        %477 = vmatpush1.msra.mxu0 0.0
        %478 = vmatprep.subr.mxu0 0.0
        %479 = vmatpush1.msra.mxu0 0.0
        %480 = vmatprep.subr.mxu0 0.0
        %481 = vmatpush1.msra.mxu0 0.0
        %482 = vmatprep.subr.mxu0 0.0
        %483 = vmatpush1.msra.mxu0 0.0
        %484 = vmatprep.subr.mxu0 0.0
        %485 = vmatpush1.msra.mxu0 0.0
        %486 = vmatprep.subr.mxu0 0.0
        %487 = vmatpush1.msra.mxu0 0.0
        %488 = vmatprep.subr.mxu0 0.0
        %489 = vmatpush1.msra.mxu0 0.0
        %490 = vmatprep.subr.mxu0 0.0
        %491 = vmatpush1.msra.mxu0 0.0
        %492 = vmatprep.subr.mxu0 0.0
        %493 = vmatpush1.msra.mxu0 0.0
        %494 = vmatprep.subr.mxu0 0.0
        %495 = vmatpush1.msra.mxu0 0.0
        %496 = vmatprep.subr.mxu0 0.0
        %497 = vmatpush1.msra.mxu0 0.0
        %498 = vmatprep.subr.mxu0 0.0
        %499 = vmatpush1.msra.mxu0 0.0
        %500 = vmatprep.subr.mxu0 0.0
        %501 = vmatpush1.msra.mxu0 0.0
        %502 = vmatprep.subr.mxu0 0.0
        %503 = vmatpush1.msra.mxu0 0.0
        %504 = vmatprep.subr.mxu0 0.0
        %505 = vmatpush1.msra.mxu0 0.0
        %506 = vmatprep.mubr.f32.mxu0 0.0
        %507 = vmatmul.mubr.f32.gmra.mrb[0].mxu0 %v343
        %v508 = vpop.f32.mrb[0].mxu0
        %v509 = vadd.f32 %v339, %v508
        %v510 = vpop.f32.mrb[0].mxu0
        %511 = vmatprep.mubr.f32.mxu0 0.0
        %512 = vmatmul.mubr.f32.gmra.mrb[0].mxu0 %v346
        %v513 = vpop.f32.mrb[0].mxu0
        %v514 = vadd.f32 %v339, %v513
        %v515 = vpop.f32.mrb[0].mxu0
        %516 = vmatprep.mubr.f32.mxu0 0.0
        %517 = vmatmul.mubr.f32.gmra.mrb[0].mxu0 %v349
        %v518 = vpop.f32.mrb[0].mxu0
        %v519 = vadd.f32 %v339, %v518
        %v520 = vpop.f32.mrb[0].mxu0
        %521 = vmatprep.mubr.f32.mxu0 0.0
        %522 = vmatmul.mubr.f32.gmra.mrb[0].mxu0 %v352
        %v523 = vpop.f32.mrb[0].mxu0
        %v524 = vadd.f32 %v339, %v523
        %v525 = vpop.f32.mrb[0].mxu0
        %526 = vmatprep.mubr.f32.mxu0 0.0
        %527 = vmatmul.mubr.f32.gmra.mrb[0].mxu0 %v355
        %v528 = vpop.f32.mrb[0].mxu0
        %v529 = vadd.f32 %v339, %v528
        %v530 = vpop.f32.mrb[0].mxu0
        %531 = vmatprep.mubr.f32.mxu0 0.0
        %532 = vmatmul.mubr.f32.gmra.mrb[0].mxu0 %v358
        %v533 = vpop.f32.mrb[0].mxu0
        %v534 = vadd.f32 %v339, %v533
        %v535 = vpop.f32.mrb[0].mxu0
        %536 = vmatprep.mubr.f32.mxu0 0.0
        %537 = vmatmul.mubr.f32.gmra.mrb[0].mxu0 %v361
        %v538 = vpop.f32.mrb[0].mxu0
        %v539 = vadd.f32 %v339, %v538
        %v540 = vpop.f32.mrb[0].mxu0
        %541 = vmatprep.mubr.f32.mxu0 0.0
        %542 = vmatmul.mubr.f32.gmra.mrb[0].mxu0 %v364
        %v543 = vpop.f32.mrb[0].mxu0
        %v544 = vadd.f32 %v339, %v543
        %v545 = vpop.f32.mrb[0].mxu0
        %546 = vmatprep.mubr.f32.mxu0 0.0
        %547 = vmatmul.mubr.f32.gmra.mrb[0].mxu0 %v367
        %v548 = vpop.f32.mrb[0].mxu0
        %v549 = vadd.f32 %v339, %v548
        %v550 = vpop.f32.mrb[0].mxu0
        %551 = vmatprep.mubr.f32.mxu0 0.0
        %552 = vmatmul.mubr.f32.gmra.mrb[0].mxu0 %v370
        %v553 = vpop.f32.mrb[0].mxu0
        %v554 = vadd.f32 %v339, %v553
        %v555 = vpop.f32.mrb[0].mxu0
        %556 = vmatprep.mubr.f32.mxu0 0.0
        %557 = vmatmul.mubr.f32.gmra.mrb[0].mxu0 %v373
        %v558 = vpop.f32.mrb[0].mxu0
        %v559 = vadd.f32 %v339, %v558
        %v560 = vpop.f32.mrb[0].mxu0
        %561 = vmatprep.mubr.f32.mxu0 0.0
        %562 = vmatmul.mubr.f32.gmra.mrb[0].mxu0 %v376
        %v563 = vpop.f32.mrb[0].mxu0
        %v564 = vadd.f32 %v339, %v563
        %v565 = vpop.f32.mrb[0].mxu0
        %566 = vmatprep.mubr.f32.mxu0 0.0
        %567 = vmatmul.mubr.f32.gmra.mrb[0].mxu0 %v379
        %v568 = vpop.f32.mrb[0].mxu0
        %v569 = vadd.f32 %v339, %v568
        %v570 = vpop.f32.mrb[0].mxu0
        %571 = vmatprep.mubr.f32.mxu0 0.0
        %572 = vmatmul.mubr.f32.gmra.mrb[0].mxu0 %v382
        %v573 = vpop.f32.mrb[0].mxu0
        %v574 = vadd.f32 %v339, %v573
        %v575 = vpop.f32.mrb[0].mxu0
        %576 = vmatprep.mubr.f32.mxu0 0.0
        %577 = vmatmul.mubr.f32.gmra.mrb[0].mxu0 %v385
        %v578 = vpop.f32.mrb[0].mxu0
        %v579 = vadd.f32 %v339, %v578
        %v580 = vpop.f32.mrb[0].mxu0
        %581 = vmatprep.mubr.f32.mxu0 0.0
        %582 = vmatmul.mubr.f32.gmra.mrb[0].mxu0 %v388
        %v583 = vpop.f32.mrb[0].mxu0
        %v584 = vadd.f32 %v339, %v583
        %v585 = vpop.f32.mrb[0].mxu0
        %586 = vmatprep.mubr.f32.mxu0 0.0
        %587 = vmatmul.mubr.f32.gmra.mrb[0].mxu0 %v391
        %v588 = vpop.f32.mrb[0].mxu0
        %v589 = vadd.f32 %v339, %v588
        %v590 = vpop.f32.mrb[0].mxu0
        %591 = vmatprep.mubr.f32.mxu0 0.0
        %592 = vmatmul.mubr.f32.gmra.mrb[0].mxu0 %v394
        %v593 = vpop.f32.mrb[0].mxu0
        %v594 = vadd.f32 %v339, %v593
        %v595 = vpop.f32.mrb[0].mxu0
        %596 = vmatprep.mubr.f32.mxu0 0.0
        %597 = vmatmul.mubr.f32.gmra.mrb[0].mxu0 %v397
        %v598 = vpop.f32.mrb[0].mxu0
        %v599 = vadd.f32 %v339, %v598
        %v600 = vpop.f32.mrb[0].mxu0
        %601 = vmatprep.mubr.f32.mxu0 0.0
        %602 = vmatmul.mubr.f32.gmra.mrb[0].mxu0 %v400
        %v603 = vpop.f32.mrb[0].mxu0
        %v604 = vadd.f32 %v339, %v603
        %v605 = vpop.f32.mrb[0].mxu0
        %606 = vmatprep.mubr.f32.mxu0 0.0
        %607 = vmatmul.mubr.f32.gmra.mrb[0].mxu0 %v403
        %v608 = vpop.f32.mrb[0].mxu0
        %v609 = vadd.f32 %v339, %v608
        %v610 = vpop.f32.mrb[0].mxu0
        %611 = vmatprep.mubr.f32.mxu0 0.0
        %612 = vmatmul.mubr.f32.gmra.mrb[0].mxu0 %v406
        %v613 = vpop.f32.mrb[0].mxu0
        %v614 = vadd.f32 %v339, %v613
        %v615 = vpop.f32.mrb[0].mxu0
        %616 = vmatprep.mubr.f32.mxu0 0.0
        %617 = vmatmul.mubr.f32.gmra.mrb[0].mxu0 %v409
        %v618 = vpop.f32.mrb[0].mxu0
        %v619 = vadd.f32 %v339, %v618
        %v620 = vpop.f32.mrb[0].mxu0
        %621 = vmatprep.mubr.f32.mxu0 0.0
        %622 = vmatmul.mubr.f32.gmra.mrb[0].mxu0 %v412
        %v623 = vpop.f32.mrb[0].mxu0
        %v624 = vadd.f32 %v339, %v623
        %v625 = vpop.f32.mrb[0].mxu0
        %626 = vmatprep.mubr.f32.mxu0 0.0
        %627 = vmatmul.mubr.f32.gmra.mrb[0].mxu0 %v415
        %v628 = vpop.f32.mrb[0].mxu0
        %v629 = vadd.f32 %v339, %v628
        %v630 = vpop.f32.mrb[0].mxu0
        %631 = vmatprep.mubr.f32.mxu0 0.0
        %632 = vmatmul.mubr.f32.gmra.mrb[0].mxu0 %v418
        %v633 = vpop.f32.mrb[0].mxu0
        %v634 = vadd.f32 %v339, %v633
        %v635 = vpop.f32.mrb[0].mxu0
        %636 = vmatprep.mubr.f32.mxu0 0.0
        %637 = vmatmul.mubr.f32.gmra.mrb[0].mxu0 %v421
        %v638 = vpop.f32.mrb[0].mxu0
        %v639 = vadd.f32 %v339, %v638
        %v640 = vpop.f32.mrb[0].mxu0
        %641 = vmatprep.mubr.f32.mxu0 0.0
        %642 = vmatmul.mubr.f32.gmra.mrb[0].mxu0 %v424
        %v643 = vpop.f32.mrb[0].mxu0
        %v644 = vadd.f32 %v339, %v643
        %v645 = vpop.f32.mrb[0].mxu0
        %646 = vmatprep.mubr.f32.mxu0 0.0
        %647 = vmatmul.mubr.f32.gmra.mrb[0].mxu0 %v427
        %v648 = vpop.f32.mrb[0].mxu0
        %v649 = vadd.f32 %v339, %v648
        %v650 = vpop.f32.mrb[0].mxu0
        %651 = vmatprep.mubr.f32.mxu0 0.0
        %652 = vmatmul.mubr.f32.gmra.mrb[0].mxu0 %v430
        %v653 = vpop.f32.mrb[0].mxu0
        %v654 = vadd.f32 %v339, %v653
        %v655 = vpop.f32.mrb[0].mxu0
        %656 = vmatprep.mubr.f32.mxu0 0.0
        %657 = vmatmul.mubr.f32.gmra.mrb[0].mxu0 %v433
        %v658 = vpop.f32.mrb[0].mxu0
        %v659 = vadd.f32 %v339, %v658
        %v660 = vpop.f32.mrb[0].mxu0
        %661 = vmatprep.mubr.f32.mxu0 0.0
        %662 = vmatmul.mubr.f32.gmra.mrb[0].mxu0 %v436
        %v663 = vpop.f32.mrb[0].mxu0
        %v664 = vadd.f32 %v339, %v663
        %v665 = vpop.f32.mrb[0].mxu0
        %666 = vdwg.mxu0
        %v667 = vmax.f32 %v509, 0.0
        %v668 = vmax.f32 %v514, 0.0
        %v669 = vmax.f32 %v519, 0.0
        %v670 = vmax.f32 %v524, 0.0
        %v671 = vmax.f32 %v529, 0.0
        %v672 = vmax.f32 %v534, 0.0
        %v673 = vmax.f32 %v539, 0.0
        %v674 = vmax.f32 %v544, 0.0
        %v675 = vmax.f32 %v549, 0.0
        %v676 = vmax.f32 %v554, 0.0
        %v677 = vmax.f32 %v559, 0.0
        %v678 = vmax.f32 %v564, 0.0
        %v679 = vmax.f32 %v569, 0.0
        %v680 = vmax.f32 %v574, 0.0
        %v681 = vmax.f32 %v579, 0.0
        %v682 = vmax.f32 %v584, 0.0
        %v683 = vmax.f32 %v589, 0.0
        %v684 = vmax.f32 %v594, 0.0
        %v685 = vmax.f32 %v599, 0.0
        %v686 = vmax.f32 %v604, 0.0
        %v687 = vmax.f32 %v609, 0.0
        %v688 = vmax.f32 %v614, 0.0
        %v689 = vmax.f32 %v619, 0.0
        %v690 = vmax.f32 %v624, 0.0
        %v691 = vmax.f32 %v629, 0.0
        %v692 = vmax.f32 %v634, 0.0
        %v693 = vmax.f32 %v639, 0.0
        %v694 = vmax.f32 %v644, 0.0
        %v695 = vmax.f32 %v649, 0.0
        %v696 = vmax.f32 %v654, 0.0
        %v697 = vmax.f32 %v659, 0.0
        %v698 = vmax.f32 %v664, 0.0
        %s699 = scalar_lea.vmem [#allocation2], 24
        %vm700 = vcmask 261120
        %701 = vst.msk [vmem:[%s699 + $0x1] sm:$0xff] %vm700, %v667
        %702 = vst.msk [vmem:[%s699 + $0x9] sm:$0xff] %vm700, %v668
        %703 = vst.msk [vmem:[%s699 + $0x19] sm:$0xff] %vm700, %v669
        %704 = vst.msk [vmem:[%s699 + $0x21] sm:$0xff] %vm700, %v670
        %705 = vst.msk [vmem:[%s699 + $0x31] sm:$0xff] %vm700, %v671
        %706 = vst.msk [vmem:[%s699 + $0x39] sm:$0xff] %vm700, %v672
        %707 = vst.msk [vmem:[%s699 + $0x49] sm:$0xff] %vm700, %v673
        %708 = vst.msk [vmem:[%s699 + $0x51] sm:$0xff] %vm700, %v674
        %709 = vst.msk [vmem:[%s699 + $0x61] sm:$0xff] %vm700, %v675
        %710 = vst.msk [vmem:[%s699 + $0x69] sm:$0xff] %vm700, %v676
        %711 = vst.msk [vmem:[%s699 + $0x79] sm:$0xff] %vm700, %v677
        %712 = vst.msk [vmem:[%s699 + $0x81] sm:$0xff] %vm700, %v678
        %713 = vst.msk [vmem:[%s699 + $0x91] sm:$0xff] %vm700, %v679
        %714 = vst.msk [vmem:[%s699 + $0x99] sm:$0xff] %vm700, %v680
        %715 = vst.msk [vmem:[%s699 + $0xa9] sm:$0xff] %vm700, %v681
        %716 = vst.msk [vmem:[%s699 + $0xb1] sm:$0xff] %vm700, %v682
        %717 = vst.msk [vmem:[%s699 + $0xc1] sm:$0xff] %vm700, %v683
        %718 = vst.msk [vmem:[%s699 + $0xc9] sm:$0xff] %vm700, %v684
        %719 = vst.msk [vmem:[%s699 + $0xd9] sm:$0xff] %vm700, %v685
        %720 = vst.msk [vmem:[%s699 + $0xe1] sm:$0xff] %vm700, %v686
        %721 = vst.msk [vmem:[%s699 + $0xf1] sm:$0xff] %vm700, %v687
        %722 = vst.msk [vmem:[%s699 + $0xf9] sm:$0xff] %vm700, %v688
        %723 = vst.msk [vmem:[%s699 + $0x109] sm:$0xff] %vm700, %v689
        %724 = vst.msk [vmem:[%s699 + $0x111] sm:$0xff] %vm700, %v690
        %725 = vst.msk [vmem:[%s699 + $0x121] sm:$0xff] %vm700, %v691
        %726 = vst.msk [vmem:[%s699 + $0x129] sm:$0xff] %vm700, %v692
        %727 = vst.msk [vmem:[%s699 + $0x139] sm:$0xff] %vm700, %v693
        %728 = vst.msk [vmem:[%s699 + $0x141] sm:$0xff] %vm700, %v694
        %729 = vst.msk [vmem:[%s699 + $0x151] sm:$0xff] %vm700, %v695
        %730 = vst.msk [vmem:[%s699 + $0x159] sm:$0xff] %vm700, %v696
        %731 = vst.msk [vmem:[%s699 + $0x169] sm:$0xff] %vm700, %v697
        %732 = vst.msk [vmem:[%s699 + $0x171] sm:$0xff] %vm700, %v698
        %733 = vst.msk [vmem:[#allocation2] sm:$0xff] %vm700, 0.0
        %734 = vst.msk [vmem:[#allocation2 + $0x8] sm:$0xff] %vm700, 0.0
        %vm735 = vcmask 254976
        %736 = vst.msk [vmem:[#allocation2 + $0x10] sm:$0x3] %vm735, 0.0
        %s737 = scalar_lea.vmem [#allocation2], 408
        %738 = vst.msk [vmem:[%s737] sm:$0xff] %vm700, 0.0
        %739 = vst.msk [vmem:[%s737 + $0x8] sm:$0xff] %vm700, 0.0
        %740 = vst.msk [vmem:[%s737 + $0x10] sm:$0x3] %vm735, 0.0
        %vm741 = vcmask 253952
        %742 = vst.msk [vmem:[#allocation2] sm:$0x1] %vm741, 0.0
        %743 = vst.msk [vmem:[#allocation2 + $0x18] sm:$0x1] %vm741, 0.0
        %744 = vst.msk [vmem:[#allocation2 + $0x30] sm:$0x1] %vm741, 0.0
        %745 = vst.msk [vmem:[#allocation2 + $0x48] sm:$0x1] %vm741, 0.0
        %746 = vst.msk [vmem:[#allocation2 + $0x60] sm:$0x1] %vm741, 0.0
        %747 = vst.msk [vmem:[#allocation2 + $0x78] sm:$0x1] %vm741, 0.0
        %748 = vst.msk [vmem:[#allocation2 + $0x90] sm:$0x1] %vm741, 0.0
        %749 = vst.msk [vmem:[#allocation2 + $0xa8] sm:$0x1] %vm741, 0.0
        %750 = vst.msk [vmem:[#allocation2 + $0xc0] sm:$0x1] %vm741, 0.0
        %751 = vst.msk [vmem:[#allocation2 + $0xd8] sm:$0x1] %vm741, 0.0
        %752 = vst.msk [vmem:[#allocation2 + $0xf0] sm:$0x1] %vm741, 0.0
        %753 = vst.msk [vmem:[#allocation2 + $0x108] sm:$0x1] %vm741, 0.0
        %754 = vst.msk [vmem:[#allocation2 + $0x120] sm:$0x1] %vm741, 0.0
        %755 = vst.msk [vmem:[#allocation2 + $0x138] sm:$0x1] %vm741, 0.0
        %756 = vst.msk [vmem:[#allocation2 + $0x150] sm:$0x1] %vm741, 0.0
        %757 = vst.msk [vmem:[#allocation2 + $0x168] sm:$0x1] %vm741, 0.0
        %758 = vst.msk [vmem:[#allocation2 + $0x180] sm:$0x1] %vm741, 0.0
        %759 = vst.msk [vmem:[#allocation2 + $0x198] sm:$0x1] %vm741, 0.0
        %760 = vst.msk [vmem:[#allocation2 + $0x11] sm:$0x1] %vm741, 0.0
        %761 = vst.msk [vmem:[#allocation2 + $0x29] sm:$0x1] %vm741, 0.0
        %762 = vst.msk [vmem:[#allocation2 + $0x41] sm:$0x1] %vm741, 0.0
        %763 = vst.msk [vmem:[#allocation2 + $0x59] sm:$0x1] %vm741, 0.0
        %764 = vst.msk [vmem:[#allocation2 + $0x71] sm:$0x1] %vm741, 0.0
        %765 = vst.msk [vmem:[#allocation2 + $0x89] sm:$0x1] %vm741, 0.0
        %766 = vst.msk [vmem:[#allocation2 + $0xa1] sm:$0x1] %vm741, 0.0
        %767 = vst.msk [vmem:[#allocation2 + $0xb9] sm:$0x1] %vm741, 0.0
        %768 = vst.msk [vmem:[#allocation2 + $0xd1] sm:$0x1] %vm741, 0.0
        %769 = vst.msk [vmem:[#allocation2 + $0xe9] sm:$0x1] %vm741, 0.0
        %770 = vst.msk [vmem:[#allocation2 + $0x101] sm:$0x1] %vm741, 0.0
        %771 = vst.msk [vmem:[#allocation2 + $0x119] sm:$0x1] %vm741, 0.0
        %772 = vst.msk [vmem:[#allocation2 + $0x131] sm:$0x1] %vm741, 0.0
        %773 = vst.msk [vmem:[#allocation2 + $0x149] sm:$0x1] %vm741, 0.0
        %774 = vst.msk [vmem:[#allocation2 + $0x161] sm:$0x1] %vm741, 0.0
        %775 = vst.msk [vmem:[#allocation2 + $0x179] sm:$0x1] %vm741, 0.0
        %776 = vst.msk [vmem:[#allocation2 + $0x191] sm:$0x1] %vm741, 0.0
        %777 = vst.msk [vmem:[#allocation2 + $0x1a9] sm:$0x1] %vm741, 0.0
        %v778 = vld [vmem:[#allocation2] sm:$0xff]
        %v779 = vld [vmem:[#allocation2 + $0x8] sm:$0xff]
        %v780 = vld [vmem:[#allocation2 + $0x18] sm:$0xff]
        %v781 = vld [vmem:[#allocation2 + $0x20] sm:$0xff]
        %v782 = vld [vmem:[#allocation2 + $0x30] sm:$0xff]
        %v783 = vld [vmem:[#allocation2 + $0x38] sm:$0xff]
        %v784 = vld [vmem:[#allocation2 + $0x48] sm:$0xff]
        %v785 = vld [vmem:[#allocation2 + $0x50] sm:$0xff]
        %v786 = vld [vmem:[#allocation2 + $0x60] sm:$0xff]
        %v787 = vld [vmem:[#allocation2 + $0x68] sm:$0xff]
        %v788 = vld [vmem:[#allocation2 + $0x78] sm:$0xff]
        %v789 = vld [vmem:[#allocation2 + $0x80] sm:$0xff]
        %v790 = vld [vmem:[#allocation2 + $0x90] sm:$0xff]
        %v791 = vld [vmem:[#allocation2 + $0x98] sm:$0xff]
        %v792 = vld [vmem:[#allocation2 + $0xa8] sm:$0xff]
        %v793 = vld [vmem:[#allocation2 + $0xb0] sm:$0xff]
        %v794 = vld [vmem:[#allocation2 + $0xc0] sm:$0xff]
        %v795 = vld [vmem:[#allocation2 + $0xc8] sm:$0xff]
        %v796 = vld [vmem:[#allocation2 + $0xd8] sm:$0xff]
        %v797 = vld [vmem:[#allocation2 + $0xe0] sm:$0xff]
        %v798 = vld [vmem:[#allocation2 + $0xf0] sm:$0xff]
        %v799 = vld [vmem:[#allocation2 + $0xf8] sm:$0xff]
        %v800 = vld [vmem:[#allocation2 + $0x108] sm:$0xff]
        %v801 = vld [vmem:[#allocation2 + $0x110] sm:$0xff]
        %v802 = vld [vmem:[#allocation2 + $0x120] sm:$0xff]
        %v803 = vld [vmem:[#allocation2 + $0x128] sm:$0xff]
        %v804 = vld [vmem:[#allocation2 + $0x138] sm:$0xff]
        %v805 = vld [vmem:[#allocation2 + $0x140] sm:$0xff]
        %v806 = vld [vmem:[#allocation2 + $0x150] sm:$0xff]
        %v807 = vld [vmem:[#allocation2 + $0x158] sm:$0xff]
        %v808 = vld [vmem:[#allocation2 + $0x168] sm:$0xff]
        %v809 = vld [vmem:[#allocation2 + $0x170] sm:$0xff]
        %v810 = vld [vmem:[#allocation2 + $0x1] sm:$0xff]
        %v811 = vld [vmem:[#allocation2 + $0x9] sm:$0xff]
        %v812 = vld [vmem:[#allocation2 + $0x19] sm:$0xff]
        %v813 = vld [vmem:[#allocation2 + $0x21] sm:$0xff]
        %v814 = vld [vmem:[#allocation2 + $0x31] sm:$0xff]
        %v815 = vld [vmem:[#allocation2 + $0x39] sm:$0xff]
        %v816 = vld [vmem:[#allocation2 + $0x49] sm:$0xff]
        %v817 = vld [vmem:[#allocation2 + $0x51] sm:$0xff]
        %v818 = vld [vmem:[#allocation2 + $0x61] sm:$0xff]
        %v819 = vld [vmem:[#allocation2 + $0x69] sm:$0xff]
        %v820 = vld [vmem:[#allocation2 + $0x79] sm:$0xff]
        %v821 = vld [vmem:[#allocation2 + $0x81] sm:$0xff]
        %v822 = vld [vmem:[#allocation2 + $0x91] sm:$0xff]
        %v823 = vld [vmem:[#allocation2 + $0x99] sm:$0xff]
        %v824 = vld [vmem:[#allocation2 + $0xa9] sm:$0xff]
        %v825 = vld [vmem:[#allocation2 + $0xb1] sm:$0xff]
        %v826 = vld [vmem:[#allocation2 + $0xc1] sm:$0xff]
        %v827 = vld [vmem:[#allocation2 + $0xc9] sm:$0xff]
        %v828 = vld [vmem:[#allocation2 + $0xd9] sm:$0xff]
        %v829 = vld [vmem:[#allocation2 + $0xe1] sm:$0xff]
        %v830 = vld [vmem:[#allocation2 + $0xf1] sm:$0xff]
        %v831 = vld [vmem:[#allocation2 + $0xf9] sm:$0xff]
        %v832 = vld [vmem:[#allocation2 + $0x109] sm:$0xff]
        %v833 = vld [vmem:[#allocation2 + $0x111] sm:$0xff]
        %v834 = vld [vmem:[#allocation2 + $0x121] sm:$0xff]
        %v835 = vld [vmem:[#allocation2 + $0x129] sm:$0xff]
        %v836 = vld [vmem:[#allocation2 + $0x139] sm:$0xff]
        %v837 = vld [vmem:[#allocation2 + $0x141] sm:$0xff]
        %v838 = vld [vmem:[#allocation2 + $0x151] sm:$0xff]
        %v839 = vld [vmem:[#allocation2 + $0x159] sm:$0xff]
        %v840 = vld [vmem:[#allocation2 + $0x169] sm:$0xff]
        %v841 = vld [vmem:[#allocation2 + $0x171] sm:$0xff]
        %v842 = vld [vmem:[#allocation2 + $0x2] sm:$0xff]
        %v843 = vld [vmem:[#allocation2 + $0xa] sm:$0xff]
        %v844 = vld [vmem:[#allocation2 + $0x1a] sm:$0xff]
        %v845 = vld [vmem:[#allocation2 + $0x22] sm:$0xff]
        %v846 = vld [vmem:[#allocation2 + $0x32] sm:$0xff]
        %v847 = vld [vmem:[#allocation2 + $0x3a] sm:$0xff]
        %v848 = vld [vmem:[#allocation2 + $0x4a] sm:$0xff]
        %v849 = vld [vmem:[#allocation2 + $0x52] sm:$0xff]
        %v850 = vld [vmem:[#allocation2 + $0x62] sm:$0xff]
        %v851 = vld [vmem:[#allocation2 + $0x6a] sm:$0xff]
        %v852 = vld [vmem:[#allocation2 + $0x7a] sm:$0xff]
        %v853 = vld [vmem:[#allocation2 + $0x82] sm:$0xff]
        %v854 = vld [vmem:[#allocation2 + $0x92] sm:$0xff]
        %v855 = vld [vmem:[#allocation2 + $0x9a] sm:$0xff]
        %v856 = vld [vmem:[#allocation2 + $0xaa] sm:$0xff]
        %v857 = vld [vmem:[#allocation2 + $0xb2] sm:$0xff]
        %v858 = vld [vmem:[#allocation2 + $0xc2] sm:$0xff]
        %v859 = vld [vmem:[#allocation2 + $0xca] sm:$0xff]
        %v860 = vld [vmem:[#allocation2 + $0xda] sm:$0xff]
        %v861 = vld [vmem:[#allocation2 + $0xe2] sm:$0xff]
        %v862 = vld [vmem:[#allocation2 + $0xf2] sm:$0xff]
        %v863 = vld [vmem:[#allocation2 + $0xfa] sm:$0xff]
        %v864 = vld [vmem:[#allocation2 + $0x10a] sm:$0xff]
        %v865 = vld [vmem:[#allocation2 + $0x112] sm:$0xff]
        %v866 = vld [vmem:[#allocation2 + $0x122] sm:$0xff]
        %v867 = vld [vmem:[#allocation2 + $0x12a] sm:$0xff]
        %v868 = vld [vmem:[#allocation2 + $0x13a] sm:$0xff]
        %v869 = vld [vmem:[#allocation2 + $0x142] sm:$0xff]
        %v870 = vld [vmem:[#allocation2 + $0x152] sm:$0xff]
        %v871 = vld [vmem:[#allocation2 + $0x15a] sm:$0xff]
        %v872 = vld [vmem:[#allocation2 + $0x16a] sm:$0xff]
        %v873 = vld [vmem:[#allocation2 + $0x172] sm:$0xff]
        %v874 = vld [vmem:[%s699] sm:$0xff]
        %v875 = vld [vmem:[%s699 + $0x8] sm:$0xff]
        %v876 = vld [vmem:[%s699 + $0x18] sm:$0xff]
        %v877 = vld [vmem:[%s699 + $0x20] sm:$0xff]
        %v878 = vld [vmem:[%s699 + $0x30] sm:$0xff]
        %v879 = vld [vmem:[%s699 + $0x38] sm:$0xff]
        %v880 = vld [vmem:[%s699 + $0x48] sm:$0xff]
        %v881 = vld [vmem:[%s699 + $0x50] sm:$0xff]
        %v882 = vld [vmem:[%s699 + $0x60] sm:$0xff]
        %v883 = vld [vmem:[%s699 + $0x68] sm:$0xff]
        %v884 = vld [vmem:[%s699 + $0x78] sm:$0xff]
        %v885 = vld [vmem:[%s699 + $0x80] sm:$0xff]
        %v886 = vld [vmem:[%s699 + $0x90] sm:$0xff]
        %v887 = vld [vmem:[%s699 + $0x98] sm:$0xff]
        %v888 = vld [vmem:[%s699 + $0xa8] sm:$0xff]
        %v889 = vld [vmem:[%s699 + $0xb0] sm:$0xff]
        %v890 = vld [vmem:[%s699 + $0xc0] sm:$0xff]
        %v891 = vld [vmem:[%s699 + $0xc8] sm:$0xff]
        %v892 = vld [vmem:[%s699 + $0xd8] sm:$0xff]
        %v893 = vld [vmem:[%s699 + $0xe0] sm:$0xff]
        %v894 = vld [vmem:[%s699 + $0xf0] sm:$0xff]
        %v895 = vld [vmem:[%s699 + $0xf8] sm:$0xff]
        %v896 = vld [vmem:[%s699 + $0x108] sm:$0xff]
        %v897 = vld [vmem:[%s699 + $0x110] sm:$0xff]
        %v898 = vld [vmem:[%s699 + $0x120] sm:$0xff]
        %v899 = vld [vmem:[%s699 + $0x128] sm:$0xff]
        %v900 = vld [vmem:[%s699 + $0x138] sm:$0xff]
        %v901 = vld [vmem:[%s699 + $0x140] sm:$0xff]
        %v902 = vld [vmem:[%s699 + $0x150] sm:$0xff]
        %v903 = vld [vmem:[%s699 + $0x158] sm:$0xff]
        %v904 = vld [vmem:[%s699 + $0x168] sm:$0xff]
        %v905 = vld [vmem:[%s699 + $0x170] sm:$0xff]
        %v906 = vld [vmem:[%s699 + $0x1] sm:$0xff]
        %v907 = vld [vmem:[%s699 + $0x9] sm:$0xff]
        %v908 = vld [vmem:[%s699 + $0x19] sm:$0xff]
        %v909 = vld [vmem:[%s699 + $0x21] sm:$0xff]
        %v910 = vld [vmem:[%s699 + $0x31] sm:$0xff]
        %v911 = vld [vmem:[%s699 + $0x39] sm:$0xff]
        %v912 = vld [vmem:[%s699 + $0x49] sm:$0xff]
        %v913 = vld [vmem:[%s699 + $0x51] sm:$0xff]
        %v914 = vld [vmem:[%s699 + $0x61] sm:$0xff]
        %v915 = vld [vmem:[%s699 + $0x69] sm:$0xff]
        %v916 = vld [vmem:[%s699 + $0x79] sm:$0xff]
        %v917 = vld [vmem:[%s699 + $0x81] sm:$0xff]
        %v918 = vld [vmem:[%s699 + $0x91] sm:$0xff]
        %v919 = vld [vmem:[%s699 + $0x99] sm:$0xff]
        %v920 = vld [vmem:[%s699 + $0xa9] sm:$0xff]
        %v921 = vld [vmem:[%s699 + $0xb1] sm:$0xff]
        %v922 = vld [vmem:[%s699 + $0xc1] sm:$0xff]
        %v923 = vld [vmem:[%s699 + $0xc9] sm:$0xff]
        %v924 = vld [vmem:[%s699 + $0xd9] sm:$0xff]
        %v925 = vld [vmem:[%s699 + $0xe1] sm:$0xff]
        %v926 = vld [vmem:[%s699 + $0xf1] sm:$0xff]
        %v927 = vld [vmem:[%s699 + $0xf9] sm:$0xff]
        %v928 = vld [vmem:[%s699 + $0x109] sm:$0xff]
        %v929 = vld [vmem:[%s699 + $0x111] sm:$0xff]
        %v930 = vld [vmem:[%s699 + $0x121] sm:$0xff]
        %v931 = vld [vmem:[%s699 + $0x129] sm:$0xff]
        %v932 = vld [vmem:[%s699 + $0x139] sm:$0xff]
        %v933 = vld [vmem:[%s699 + $0x141] sm:$0xff]
        %v934 = vld [vmem:[%s699 + $0x151] sm:$0xff]
        %v935 = vld [vmem:[%s699 + $0x159] sm:$0xff]
        %v936 = vld [vmem:[%s699 + $0x169] sm:$0xff]
        %v937 = vld [vmem:[%s699 + $0x171] sm:$0xff]
        %v938 = vld [vmem:[%s699 + $0x2] sm:$0xff]
        %v939 = vld [vmem:[%s699 + $0xa] sm:$0xff]
        %v940 = vld [vmem:[%s699 + $0x1a] sm:$0xff]
        %v941 = vld [vmem:[%s699 + $0x22] sm:$0xff]
        %v942 = vld [vmem:[%s699 + $0x32] sm:$0xff]
        %v943 = vld [vmem:[%s699 + $0x3a] sm:$0xff]
        %v944 = vld [vmem:[%s699 + $0x4a] sm:$0xff]
        %v945 = vld [vmem:[%s699 + $0x52] sm:$0xff]
        %v946 = vld [vmem:[%s699 + $0x62] sm:$0xff]
        %v947 = vld [vmem:[%s699 + $0x6a] sm:$0xff]
        %v948 = vld [vmem:[%s699 + $0x7a] sm:$0xff]
        %v949 = vld [vmem:[%s699 + $0x82] sm:$0xff]
        %v950 = vld [vmem:[%s699 + $0x92] sm:$0xff]
        %v951 = vld [vmem:[%s699 + $0x9a] sm:$0xff]
        %v952 = vld [vmem:[%s699 + $0xaa] sm:$0xff]
        %v953 = vld [vmem:[%s699 + $0xb2] sm:$0xff]
        %v954 = vld [vmem:[%s699 + $0xc2] sm:$0xff]
        %v955 = vld [vmem:[%s699 + $0xca] sm:$0xff]
        %v956 = vld [vmem:[%s699 + $0xda] sm:$0xff]
        %v957 = vld [vmem:[%s699 + $0xe2] sm:$0xff]
        %v958 = vld [vmem:[%s699 + $0xf2] sm:$0xff]
        %v959 = vld [vmem:[%s699 + $0xfa] sm:$0xff]
        %v960 = vld [vmem:[%s699 + $0x10a] sm:$0xff]
        %v961 = vld [vmem:[%s699 + $0x112] sm:$0xff]
        %v962 = vld [vmem:[%s699 + $0x122] sm:$0xff]
        %v963 = vld [vmem:[%s699 + $0x12a] sm:$0xff]
        %v964 = vld [vmem:[%s699 + $0x13a] sm:$0xff]
        %v965 = vld [vmem:[%s699 + $0x142] sm:$0xff]
        %v966 = vld [vmem:[%s699 + $0x152] sm:$0xff]
        %v967 = vld [vmem:[%s699 + $0x15a] sm:$0xff]
        %v968 = vld [vmem:[%s699 + $0x16a] sm:$0xff]
        %v969 = vld [vmem:[%s699 + $0x172] sm:$0xff]
        %s970 = scalar_lea.vmem [#allocation2], 48
        %v971 = vld [vmem:[%s970] sm:$0xff]
        %v972 = vld [vmem:[%s970 + $0x8] sm:$0xff]
        %v973 = vld [vmem:[%s970 + $0x18] sm:$0xff]
        %v974 = vld [vmem:[%s970 + $0x20] sm:$0xff]
        %v975 = vld [vmem:[%s970 + $0x30] sm:$0xff]
        %v976 = vld [vmem:[%s970 + $0x38] sm:$0xff]
        %v977 = vld [vmem:[%s970 + $0x48] sm:$0xff]
        %v978 = vld [vmem:[%s970 + $0x50] sm:$0xff]
        %v979 = vld [vmem:[%s970 + $0x60] sm:$0xff]
        %v980 = vld [vmem:[%s970 + $0x68] sm:$0xff]
        %v981 = vld [vmem:[%s970 + $0x78] sm:$0xff]
        %v982 = vld [vmem:[%s970 + $0x80] sm:$0xff]
        %v983 = vld [vmem:[%s970 + $0x90] sm:$0xff]
        %v984 = vld [vmem:[%s970 + $0x98] sm:$0xff]
        %v985 = vld [vmem:[%s970 + $0xa8] sm:$0xff]
        %v986 = vld [vmem:[%s970 + $0xb0] sm:$0xff]
        %v987 = vld [vmem:[%s970 + $0xc0] sm:$0xff]
        %v988 = vld [vmem:[%s970 + $0xc8] sm:$0xff]
        %v989 = vld [vmem:[%s970 + $0xd8] sm:$0xff]
        %v990 = vld [vmem:[%s970 + $0xe0] sm:$0xff]
        %v991 = vld [vmem:[%s970 + $0xf0] sm:$0xff]
        %v992 = vld [vmem:[%s970 + $0xf8] sm:$0xff]
        %v993 = vld [vmem:[%s970 + $0x108] sm:$0xff]
        %v994 = vld [vmem:[%s970 + $0x110] sm:$0xff]
        %v995 = vld [vmem:[%s970 + $0x120] sm:$0xff]
        %v996 = vld [vmem:[%s970 + $0x128] sm:$0xff]
        %v997 = vld [vmem:[%s970 + $0x138] sm:$0xff]
        %v998 = vld [vmem:[%s970 + $0x140] sm:$0xff]
        %v999 = vld [vmem:[%s970 + $0x150] sm:$0xff]
        %v1000 = vld [vmem:[%s970 + $0x158] sm:$0xff]
        %v1001 = vld [vmem:[%s970 + $0x168] sm:$0xff]
        %v1002 = vld [vmem:[%s970 + $0x170] sm:$0xff]
        %v1003 = vld [vmem:[%s970 + $0x1] sm:$0xff]
        %v1004 = vld [vmem:[%s970 + $0x9] sm:$0xff]
        %v1005 = vld [vmem:[%s970 + $0x19] sm:$0xff]
        %v1006 = vld [vmem:[%s970 + $0x21] sm:$0xff]
        %v1007 = vld [vmem:[%s970 + $0x31] sm:$0xff]
        %v1008 = vld [vmem:[%s970 + $0x39] sm:$0xff]
        %v1009 = vld [vmem:[%s970 + $0x49] sm:$0xff]
        %v1010 = vld [vmem:[%s970 + $0x51] sm:$0xff]
        %v1011 = vld [vmem:[%s970 + $0x61] sm:$0xff]
        %v1012 = vld [vmem:[%s970 + $0x69] sm:$0xff]
        %v1013 = vld [vmem:[%s970 + $0x79] sm:$0xff]
        %v1014 = vld [vmem:[%s970 + $0x81] sm:$0xff]
        %v1015 = vld [vmem:[%s970 + $0x91] sm:$0xff]
        %v1016 = vld [vmem:[%s970 + $0x99] sm:$0xff]
        %v1017 = vld [vmem:[%s970 + $0xa9] sm:$0xff]
        %v1018 = vld [vmem:[%s970 + $0xb1] sm:$0xff]
        %v1019 = vld [vmem:[%s970 + $0xc1] sm:$0xff]
        %v1020 = vld [vmem:[%s970 + $0xc9] sm:$0xff]
        %v1021 = vld [vmem:[%s970 + $0xd9] sm:$0xff]
        %v1022 = vld [vmem:[%s970 + $0xe1] sm:$0xff]
        %v1023 = vld [vmem:[%s970 + $0xf1] sm:$0xff]
        %v1024 = vld [vmem:[%s970 + $0xf9] sm:$0xff]
        %v1025 = vld [vmem:[%s970 + $0x109] sm:$0xff]
        %v1026 = vld [vmem:[%s970 + $0x111] sm:$0xff]
        %v1027 = vld [vmem:[%s970 + $0x121] sm:$0xff]
        %v1028 = vld [vmem:[%s970 + $0x129] sm:$0xff]
        %v1029 = vld [vmem:[%s970 + $0x139] sm:$0xff]
        %v1030 = vld [vmem:[%s970 + $0x141] sm:$0xff]
        %v1031 = vld [vmem:[%s970 + $0x151] sm:$0xff]
        %v1032 = vld [vmem:[%s970 + $0x159] sm:$0xff]
        %v1033 = vld [vmem:[%s970 + $0x169] sm:$0xff]
        %v1034 = vld [vmem:[%s970 + $0x171] sm:$0xff]
        %v1035 = vld [vmem:[%s970 + $0x2] sm:$0xff]
        %v1036 = vld [vmem:[%s970 + $0xa] sm:$0xff]
        %v1037 = vld [vmem:[%s970 + $0x1a] sm:$0xff]
        %v1038 = vld [vmem:[%s970 + $0x22] sm:$0xff]
        %v1039 = vld [vmem:[%s970 + $0x32] sm:$0xff]
        %v1040 = vld [vmem:[%s970 + $0x3a] sm:$0xff]
        %v1041 = vld [vmem:[%s970 + $0x4a] sm:$0xff]
        %v1042 = vld [vmem:[%s970 + $0x52] sm:$0xff]
        %v1043 = vld [vmem:[%s970 + $0x62] sm:$0xff]
        %v1044 = vld [vmem:[%s970 + $0x6a] sm:$0xff]
        %v1045 = vld [vmem:[%s970 + $0x7a] sm:$0xff]
        %v1046 = vld [vmem:[%s970 + $0x82] sm:$0xff]
        %v1047 = vld [vmem:[%s970 + $0x92] sm:$0xff]
        %v1048 = vld [vmem:[%s970 + $0x9a] sm:$0xff]
        %v1049 = vld [vmem:[%s970 + $0xaa] sm:$0xff]
        %v1050 = vld [vmem:[%s970 + $0xb2] sm:$0xff]
        %v1051 = vld [vmem:[%s970 + $0xc2] sm:$0xff]
        %v1052 = vld [vmem:[%s970 + $0xca] sm:$0xff]
        %v1053 = vld [vmem:[%s970 + $0xda] sm:$0xff]
        %v1054 = vld [vmem:[%s970 + $0xe2] sm:$0xff]
        %v1055 = vld [vmem:[%s970 + $0xf2] sm:$0xff]
        %v1056 = vld [vmem:[%s970 + $0xfa] sm:$0xff]
        %v1057 = vld [vmem:[%s970 + $0x10a] sm:$0xff]
        %v1058 = vld [vmem:[%s970 + $0x112] sm:$0xff]
        %v1059 = vld [vmem:[%s970 + $0x122] sm:$0xff]
        %v1060 = vld [vmem:[%s970 + $0x12a] sm:$0xff]
        %v1061 = vld [vmem:[%s970 + $0x13a] sm:$0xff]
        %v1062 = vld [vmem:[%s970 + $0x142] sm:$0xff]
        %v1063 = vld [vmem:[%s970 + $0x152] sm:$0xff]
        %v1064 = vld [vmem:[%s970 + $0x15a] sm:$0xff]
        %v1065 = vld [vmem:[%s970 + $0x16a] sm:$0xff]
        %v1066 = vld [vmem:[%s970 + $0x172] sm:$0xff]
        %1099 = vrot.lane.b32.xlu0 %v810, 32
        %v1100 = vpop.permute.xlu0 %1099
        %1101 = vrot.lane.b32.xlu0 %v811, 32
        %v1102 = vpop.permute.xlu0 %1101
        %1103 = vrot.lane.b32.xlu0 %v812, 32
        %v1104 = vpop.permute.xlu0 %1103
        %1105 = vrot.lane.b32.xlu0 %v813, 32
        %v1106 = vpop.permute.xlu0 %1105
        %1107 = vrot.lane.b32.xlu0 %v814, 32
        %v1108 = vpop.permute.xlu0 %1107
        %1109 = vrot.lane.b32.xlu0 %v815, 32
        %v1110 = vpop.permute.xlu0 %1109
        %1111 = vrot.lane.b32.xlu0 %v816, 32
        %v1112 = vpop.permute.xlu0 %1111
        %1113 = vrot.lane.b32.xlu0 %v817, 32
        %v1114 = vpop.permute.xlu0 %1113
        %1115 = vrot.lane.b32.xlu0 %v818, 32
        %v1116 = vpop.permute.xlu0 %1115
        %1117 = vrot.lane.b32.xlu0 %v819, 32
        %v1118 = vpop.permute.xlu0 %1117
        %1119 = vrot.lane.b32.xlu0 %v820, 32
        %v1120 = vpop.permute.xlu0 %1119
        %1121 = vrot.lane.b32.xlu0 %v821, 32
        %v1122 = vpop.permute.xlu0 %1121
        %1123 = vrot.lane.b32.xlu0 %v822, 32
        %v1124 = vpop.permute.xlu0 %1123
        %1125 = vrot.lane.b32.xlu0 %v823, 32
        %v1126 = vpop.permute.xlu0 %1125
        %1127 = vrot.lane.b32.xlu0 %v824, 32
        %v1128 = vpop.permute.xlu0 %1127
        %1129 = vrot.lane.b32.xlu0 %v825, 32
        %v1130 = vpop.permute.xlu0 %1129
        %1131 = vrot.lane.b32.xlu0 %v826, 32
        %v1132 = vpop.permute.xlu0 %1131
        %1133 = vrot.lane.b32.xlu0 %v827, 32
        %v1134 = vpop.permute.xlu0 %1133
        %1135 = vrot.lane.b32.xlu0 %v828, 32
        %v1136 = vpop.permute.xlu0 %1135
        %1137 = vrot.lane.b32.xlu0 %v829, 32
        %v1138 = vpop.permute.xlu0 %1137
        %1139 = vrot.lane.b32.xlu0 %v830, 32
        %v1140 = vpop.permute.xlu0 %1139
        %1141 = vrot.lane.b32.xlu0 %v831, 32
        %v1142 = vpop.permute.xlu0 %1141
        %1143 = vrot.lane.b32.xlu0 %v832, 32
        %v1144 = vpop.permute.xlu0 %1143
        %1145 = vrot.lane.b32.xlu0 %v833, 32
        %v1146 = vpop.permute.xlu0 %1145
        %1147 = vrot.lane.b32.xlu0 %v834, 32
        %v1148 = vpop.permute.xlu0 %1147
        %1149 = vrot.lane.b32.xlu0 %v835, 32
        %v1150 = vpop.permute.xlu0 %1149
        %1151 = vrot.lane.b32.xlu0 %v836, 32
        %v1152 = vpop.permute.xlu0 %1151
        %1153 = vrot.lane.b32.xlu0 %v837, 32
        %v1154 = vpop.permute.xlu0 %1153
        %1155 = vrot.lane.b32.xlu0 %v838, 32
        %v1156 = vpop.permute.xlu0 %1155
        %1157 = vrot.lane.b32.xlu0 %v839, 32
        %v1158 = vpop.permute.xlu0 %1157
        %1159 = vrot.lane.b32.xlu0 %v840, 32
        %v1160 = vpop.permute.xlu0 %1159
        %1161 = vrot.lane.b32.xlu0 %v841, 32
        %v1162 = vpop.permute.xlu0 %1161
        %1227 = vrot.lane.b32.xlu0 %v842, 64
        %v1228 = vpop.permute.xlu0 %1227
        %1229 = vrot.lane.b32.xlu0 %v843, 64
        %v1230 = vpop.permute.xlu0 %1229
        %1231 = vrot.lane.b32.xlu0 %v844, 64
        %v1232 = vpop.permute.xlu0 %1231
        %1233 = vrot.lane.b32.xlu0 %v845, 64
        %v1234 = vpop.permute.xlu0 %1233
        %1235 = vrot.lane.b32.xlu0 %v846, 64
        %v1236 = vpop.permute.xlu0 %1235
        %1237 = vrot.lane.b32.xlu0 %v847, 64
        %v1238 = vpop.permute.xlu0 %1237
        %1239 = vrot.lane.b32.xlu0 %v848, 64
        %v1240 = vpop.permute.xlu0 %1239
        %1241 = vrot.lane.b32.xlu0 %v849, 64
        %v1242 = vpop.permute.xlu0 %1241
        %1243 = vrot.lane.b32.xlu0 %v850, 64
        %v1244 = vpop.permute.xlu0 %1243
        %1245 = vrot.lane.b32.xlu0 %v851, 64
        %v1246 = vpop.permute.xlu0 %1245
        %1247 = vrot.lane.b32.xlu0 %v852, 64
        %v1248 = vpop.permute.xlu0 %1247
        %1249 = vrot.lane.b32.xlu0 %v853, 64
        %v1250 = vpop.permute.xlu0 %1249
        %1251 = vrot.lane.b32.xlu0 %v854, 64
        %v1252 = vpop.permute.xlu0 %1251
        %1253 = vrot.lane.b32.xlu0 %v855, 64
        %v1254 = vpop.permute.xlu0 %1253
        %1255 = vrot.lane.b32.xlu0 %v856, 64
        %v1256 = vpop.permute.xlu0 %1255
        %1257 = vrot.lane.b32.xlu0 %v857, 64
        %v1258 = vpop.permute.xlu0 %1257
        %1259 = vrot.lane.b32.xlu0 %v858, 64
        %v1260 = vpop.permute.xlu0 %1259
        %1261 = vrot.lane.b32.xlu0 %v859, 64
        %v1262 = vpop.permute.xlu0 %1261
        %1263 = vrot.lane.b32.xlu0 %v860, 64
        %v1264 = vpop.permute.xlu0 %1263
        %1265 = vrot.lane.b32.xlu0 %v861, 64
        %v1266 = vpop.permute.xlu0 %1265
        %1267 = vrot.lane.b32.xlu0 %v862, 64
        %v1268 = vpop.permute.xlu0 %1267
        %1269 = vrot.lane.b32.xlu0 %v863, 64
        %v1270 = vpop.permute.xlu0 %1269
        %1271 = vrot.lane.b32.xlu0 %v864, 64
        %v1272 = vpop.permute.xlu0 %1271
        %1273 = vrot.lane.b32.xlu0 %v865, 64
        %v1274 = vpop.permute.xlu0 %1273
        %1275 = vrot.lane.b32.xlu0 %v866, 64
        %v1276 = vpop.permute.xlu0 %1275
        %1277 = vrot.lane.b32.xlu0 %v867, 64
        %v1278 = vpop.permute.xlu0 %1277
        %1279 = vrot.lane.b32.xlu0 %v868, 64
        %v1280 = vpop.permute.xlu0 %1279
        %1281 = vrot.lane.b32.xlu0 %v869, 64
        %v1282 = vpop.permute.xlu0 %1281
        %1283 = vrot.lane.b32.xlu0 %v870, 64
        %v1284 = vpop.permute.xlu0 %1283
        %1285 = vrot.lane.b32.xlu0 %v871, 64
        %v1286 = vpop.permute.xlu0 %1285
        %1287 = vrot.lane.b32.xlu0 %v872, 64
        %v1288 = vpop.permute.xlu0 %1287
        %1289 = vrot.lane.b32.xlu0 %v873, 64
        %v1290 = vpop.permute.xlu0 %1289
        %1355 = vrot.lane.b32.xlu0 %v874, 96
        %v1356 = vpop.permute.xlu0 %1355
        %1357 = vrot.lane.b32.xlu0 %v875, 96
        %v1358 = vpop.permute.xlu0 %1357
        %1359 = vrot.lane.b32.xlu0 %v876, 96
        %v1360 = vpop.permute.xlu0 %1359
        %1361 = vrot.lane.b32.xlu0 %v877, 96
        %v1362 = vpop.permute.xlu0 %1361
        %1363 = vrot.lane.b32.xlu0 %v878, 96
        %v1364 = vpop.permute.xlu0 %1363
        %1365 = vrot.lane.b32.xlu0 %v879, 96
        %v1366 = vpop.permute.xlu0 %1365
        %1367 = vrot.lane.b32.xlu0 %v880, 96
        %v1368 = vpop.permute.xlu0 %1367
        %1369 = vrot.lane.b32.xlu0 %v881, 96
        %v1370 = vpop.permute.xlu0 %1369
        %1371 = vrot.lane.b32.xlu0 %v882, 96
        %v1372 = vpop.permute.xlu0 %1371
        %1373 = vrot.lane.b32.xlu0 %v883, 96
        %v1374 = vpop.permute.xlu0 %1373
        %1375 = vrot.lane.b32.xlu0 %v884, 96
        %v1376 = vpop.permute.xlu0 %1375
        %1377 = vrot.lane.b32.xlu0 %v885, 96
        %v1378 = vpop.permute.xlu0 %1377
        %1379 = vrot.lane.b32.xlu0 %v886, 96
        %v1380 = vpop.permute.xlu0 %1379
        %1381 = vrot.lane.b32.xlu0 %v887, 96
        %v1382 = vpop.permute.xlu0 %1381
        %1383 = vrot.lane.b32.xlu0 %v888, 96
        %v1384 = vpop.permute.xlu0 %1383
        %1385 = vrot.lane.b32.xlu0 %v889, 96
        %v1386 = vpop.permute.xlu0 %1385
        %1387 = vrot.lane.b32.xlu0 %v890, 96
        %v1388 = vpop.permute.xlu0 %1387
        %1389 = vrot.lane.b32.xlu0 %v891, 96
        %v1390 = vpop.permute.xlu0 %1389
        %1391 = vrot.lane.b32.xlu0 %v892, 96
        %v1392 = vpop.permute.xlu0 %1391
        %1393 = vrot.lane.b32.xlu0 %v893, 96
        %v1394 = vpop.permute.xlu0 %1393
        %1395 = vrot.lane.b32.xlu0 %v894, 96
        %v1396 = vpop.permute.xlu0 %1395
        %1397 = vrot.lane.b32.xlu0 %v895, 96
        %v1398 = vpop.permute.xlu0 %1397
        %1399 = vrot.lane.b32.xlu0 %v896, 96
        %v1400 = vpop.permute.xlu0 %1399
        %1401 = vrot.lane.b32.xlu0 %v897, 96
        %v1402 = vpop.permute.xlu0 %1401
        %1403 = vrot.lane.b32.xlu0 %v898, 96
        %v1404 = vpop.permute.xlu0 %1403
        %1405 = vrot.lane.b32.xlu0 %v899, 96
        %v1406 = vpop.permute.xlu0 %1405
        %1407 = vrot.lane.b32.xlu0 %v900, 96
        %v1408 = vpop.permute.xlu0 %1407
        %1409 = vrot.lane.b32.xlu0 %v901, 96
        %v1410 = vpop.permute.xlu0 %1409
        %1411 = vrot.lane.b32.xlu0 %v902, 96
        %v1412 = vpop.permute.xlu0 %1411
        %1413 = vrot.lane.b32.xlu0 %v903, 96
        %v1414 = vpop.permute.xlu0 %1413
        %1415 = vrot.lane.b32.xlu0 %v904, 96
        %v1416 = vpop.permute.xlu0 %1415
        %1417 = vrot.lane.b32.xlu0 %v905, 96
        %v1418 = vpop.permute.xlu0 %1417
        %1483 = vrot.lane.b32.xlu0 %v938, 32
        %v1484 = vpop.permute.xlu0 %1483
        %1485 = vrot.lane.b32.xlu0 %v939, 32
        %v1486 = vpop.permute.xlu0 %1485
        %1487 = vrot.lane.b32.xlu0 %v940, 32
        %v1488 = vpop.permute.xlu0 %1487
        %1489 = vrot.lane.b32.xlu0 %v941, 32
        %v1490 = vpop.permute.xlu0 %1489
        %1491 = vrot.lane.b32.xlu0 %v942, 32
        %v1492 = vpop.permute.xlu0 %1491
        %1493 = vrot.lane.b32.xlu0 %v943, 32
        %v1494 = vpop.permute.xlu0 %1493
        %1495 = vrot.lane.b32.xlu0 %v944, 32
        %v1496 = vpop.permute.xlu0 %1495
        %1497 = vrot.lane.b32.xlu0 %v945, 32
        %v1498 = vpop.permute.xlu0 %1497
        %1499 = vrot.lane.b32.xlu0 %v946, 32
        %v1500 = vpop.permute.xlu0 %1499
        %1501 = vrot.lane.b32.xlu0 %v947, 32
        %v1502 = vpop.permute.xlu0 %1501
        %1503 = vrot.lane.b32.xlu0 %v948, 32
        %v1504 = vpop.permute.xlu0 %1503
        %1505 = vrot.lane.b32.xlu0 %v949, 32
        %v1506 = vpop.permute.xlu0 %1505
        %1507 = vrot.lane.b32.xlu0 %v950, 32
        %v1508 = vpop.permute.xlu0 %1507
        %1509 = vrot.lane.b32.xlu0 %v951, 32
        %v1510 = vpop.permute.xlu0 %1509
        %1511 = vrot.lane.b32.xlu0 %v952, 32
        %v1512 = vpop.permute.xlu0 %1511
        %1513 = vrot.lane.b32.xlu0 %v953, 32
        %v1514 = vpop.permute.xlu0 %1513
        %1515 = vrot.lane.b32.xlu0 %v954, 32
        %v1516 = vpop.permute.xlu0 %1515
        %1517 = vrot.lane.b32.xlu0 %v955, 32
        %v1518 = vpop.permute.xlu0 %1517
        %1519 = vrot.lane.b32.xlu0 %v956, 32
        %v1520 = vpop.permute.xlu0 %1519
        %1521 = vrot.lane.b32.xlu0 %v957, 32
        %v1522 = vpop.permute.xlu0 %1521
        %1523 = vrot.lane.b32.xlu0 %v958, 32
        %v1524 = vpop.permute.xlu0 %1523
        %1525 = vrot.lane.b32.xlu0 %v959, 32
        %v1526 = vpop.permute.xlu0 %1525
        %1527 = vrot.lane.b32.xlu0 %v960, 32
        %v1528 = vpop.permute.xlu0 %1527
        %1529 = vrot.lane.b32.xlu0 %v961, 32
        %v1530 = vpop.permute.xlu0 %1529
        %1531 = vrot.lane.b32.xlu0 %v962, 32
        %v1532 = vpop.permute.xlu0 %1531
        %1533 = vrot.lane.b32.xlu0 %v963, 32
        %v1534 = vpop.permute.xlu0 %1533
        %1535 = vrot.lane.b32.xlu0 %v964, 32
        %v1536 = vpop.permute.xlu0 %1535
        %1537 = vrot.lane.b32.xlu0 %v965, 32
        %v1538 = vpop.permute.xlu0 %1537
        %1539 = vrot.lane.b32.xlu0 %v966, 32
        %v1540 = vpop.permute.xlu0 %1539
        %1541 = vrot.lane.b32.xlu0 %v967, 32
        %v1542 = vpop.permute.xlu0 %1541
        %1543 = vrot.lane.b32.xlu0 %v968, 32
        %v1544 = vpop.permute.xlu0 %1543
        %1545 = vrot.lane.b32.xlu0 %v969, 32
        %v1546 = vpop.permute.xlu0 %1545
        %1611 = vrot.lane.b32.xlu0 %v971, 64
        %v1612 = vpop.permute.xlu0 %1611
        %1613 = vrot.lane.b32.xlu0 %v972, 64
        %v1614 = vpop.permute.xlu0 %1613
        %1615 = vrot.lane.b32.xlu0 %v973, 64
        %v1616 = vpop.permute.xlu0 %1615
        %1617 = vrot.lane.b32.xlu0 %v974, 64
        %v1618 = vpop.permute.xlu0 %1617
        %1619 = vrot.lane.b32.xlu0 %v975, 64
        %v1620 = vpop.permute.xlu0 %1619
        %1621 = vrot.lane.b32.xlu0 %v976, 64
        %v1622 = vpop.permute.xlu0 %1621
        %1623 = vrot.lane.b32.xlu0 %v977, 64
        %v1624 = vpop.permute.xlu0 %1623
        %1625 = vrot.lane.b32.xlu0 %v978, 64
        %v1626 = vpop.permute.xlu0 %1625
        %1627 = vrot.lane.b32.xlu0 %v979, 64
        %v1628 = vpop.permute.xlu0 %1627
        %1629 = vrot.lane.b32.xlu0 %v980, 64
        %v1630 = vpop.permute.xlu0 %1629
        %1631 = vrot.lane.b32.xlu0 %v981, 64
        %v1632 = vpop.permute.xlu0 %1631
        %1633 = vrot.lane.b32.xlu0 %v982, 64
        %v1634 = vpop.permute.xlu0 %1633
        %1635 = vrot.lane.b32.xlu0 %v983, 64
        %v1636 = vpop.permute.xlu0 %1635
        %1637 = vrot.lane.b32.xlu0 %v984, 64
        %v1638 = vpop.permute.xlu0 %1637
        %1639 = vrot.lane.b32.xlu0 %v985, 64
        %v1640 = vpop.permute.xlu0 %1639
        %1641 = vrot.lane.b32.xlu0 %v986, 64
        %v1642 = vpop.permute.xlu0 %1641
        %1643 = vrot.lane.b32.xlu0 %v987, 64
        %v1644 = vpop.permute.xlu0 %1643
        %1645 = vrot.lane.b32.xlu0 %v988, 64
        %v1646 = vpop.permute.xlu0 %1645
        %1647 = vrot.lane.b32.xlu0 %v989, 64
        %v1648 = vpop.permute.xlu0 %1647
        %1649 = vrot.lane.b32.xlu0 %v990, 64
        %v1650 = vpop.permute.xlu0 %1649
        %1651 = vrot.lane.b32.xlu0 %v991, 64
        %v1652 = vpop.permute.xlu0 %1651
        %1653 = vrot.lane.b32.xlu0 %v992, 64
        %v1654 = vpop.permute.xlu0 %1653
        %1655 = vrot.lane.b32.xlu0 %v993, 64
        %v1656 = vpop.permute.xlu0 %1655
        %1657 = vrot.lane.b32.xlu0 %v994, 64
        %v1658 = vpop.permute.xlu0 %1657
        %1659 = vrot.lane.b32.xlu0 %v995, 64
        %v1660 = vpop.permute.xlu0 %1659
        %1661 = vrot.lane.b32.xlu0 %v996, 64
        %v1662 = vpop.permute.xlu0 %1661
        %1663 = vrot.lane.b32.xlu0 %v997, 64
        %v1664 = vpop.permute.xlu0 %1663
        %1665 = vrot.lane.b32.xlu0 %v998, 64
        %v1666 = vpop.permute.xlu0 %1665
        %1667 = vrot.lane.b32.xlu0 %v999, 64
        %v1668 = vpop.permute.xlu0 %1667
        %1669 = vrot.lane.b32.xlu0 %v1000, 64
        %v1670 = vpop.permute.xlu0 %1669
        %1671 = vrot.lane.b32.xlu0 %v1001, 64
        %v1672 = vpop.permute.xlu0 %1671
        %1673 = vrot.lane.b32.xlu0 %v1002, 64
        %v1674 = vpop.permute.xlu0 %1673
        %1739 = vrot.lane.b32.xlu0 %v1003, 96
        %v1740 = vpop.permute.xlu0 %1739
        %1741 = vrot.lane.b32.xlu0 %v1004, 96
        %v1742 = vpop.permute.xlu0 %1741
        %1743 = vrot.lane.b32.xlu0 %v1005, 96
        %v1744 = vpop.permute.xlu0 %1743
        %1745 = vrot.lane.b32.xlu0 %v1006, 96
        %v1746 = vpop.permute.xlu0 %1745
        %1747 = vrot.lane.b32.xlu0 %v1007, 96
        %v1748 = vpop.permute.xlu0 %1747
        %1749 = vrot.lane.b32.xlu0 %v1008, 96
        %v1750 = vpop.permute.xlu0 %1749
        %1751 = vrot.lane.b32.xlu0 %v1009, 96
        %v1752 = vpop.permute.xlu0 %1751
        %1753 = vrot.lane.b32.xlu0 %v1010, 96
        %v1754 = vpop.permute.xlu0 %1753
        %1755 = vrot.lane.b32.xlu0 %v1011, 96
        %v1756 = vpop.permute.xlu0 %1755
        %1757 = vrot.lane.b32.xlu0 %v1012, 96
        %v1758 = vpop.permute.xlu0 %1757
        %1759 = vrot.lane.b32.xlu0 %v1013, 96
        %v1760 = vpop.permute.xlu0 %1759
        %1761 = vrot.lane.b32.xlu0 %v1014, 96
        %v1762 = vpop.permute.xlu0 %1761
        %1763 = vrot.lane.b32.xlu0 %v1015, 96
        %v1764 = vpop.permute.xlu0 %1763
        %1765 = vrot.lane.b32.xlu0 %v1016, 96
        %v1766 = vpop.permute.xlu0 %1765
        %1767 = vrot.lane.b32.xlu0 %v1017, 96
        %v1768 = vpop.permute.xlu0 %1767
        %1769 = vrot.lane.b32.xlu0 %v1018, 96
        %v1770 = vpop.permute.xlu0 %1769
        %1771 = vrot.lane.b32.xlu0 %v1019, 96
        %v1772 = vpop.permute.xlu0 %1771
        %1773 = vrot.lane.b32.xlu0 %v1020, 96
        %v1774 = vpop.permute.xlu0 %1773
        %1775 = vrot.lane.b32.xlu0 %v1021, 96
        %v1776 = vpop.permute.xlu0 %1775
        %1777 = vrot.lane.b32.xlu0 %v1022, 96
        %v1778 = vpop.permute.xlu0 %1777
        %1779 = vrot.lane.b32.xlu0 %v1023, 96
        %v1780 = vpop.permute.xlu0 %1779
        %1781 = vrot.lane.b32.xlu0 %v1024, 96
        %v1782 = vpop.permute.xlu0 %1781
        %1783 = vrot.lane.b32.xlu0 %v1025, 96
        %v1784 = vpop.permute.xlu0 %1783
        %1785 = vrot.lane.b32.xlu0 %v1026, 96
        %v1786 = vpop.permute.xlu0 %1785
        %1787 = vrot.lane.b32.xlu0 %v1027, 96
        %v1788 = vpop.permute.xlu0 %1787
        %1789 = vrot.lane.b32.xlu0 %v1028, 96
        %v1790 = vpop.permute.xlu0 %1789
        %1791 = vrot.lane.b32.xlu0 %v1029, 96
        %v1792 = vpop.permute.xlu0 %1791
        %1793 = vrot.lane.b32.xlu0 %v1030, 96
        %v1794 = vpop.permute.xlu0 %1793
        %1795 = vrot.lane.b32.xlu0 %v1031, 96
        %v1796 = vpop.permute.xlu0 %1795
        %1797 = vrot.lane.b32.xlu0 %v1032, 96
        %v1798 = vpop.permute.xlu0 %1797
        %1799 = vrot.lane.b32.xlu0 %v1033, 96
        %v1800 = vpop.permute.xlu0 %1799
        %1801 = vrot.lane.b32.xlu0 %v1034, 96
        %v1802 = vpop.permute.xlu0 %1801
        %v1835 = vsel %vm700, %v778, %v1100
        %v1836 = vsel %vm700, %v779, %v1102
        %v1837 = vsel %vm700, %v780, %v1104
        %v1838 = vsel %vm700, %v781, %v1106
        %v1839 = vsel %vm700, %v782, %v1108
        %v1840 = vsel %vm700, %v783, %v1110
        %v1841 = vsel %vm700, %v784, %v1112
        %v1842 = vsel %vm700, %v785, %v1114
        %v1843 = vsel %vm700, %v786, %v1116
        %v1844 = vsel %vm700, %v787, %v1118
        %v1845 = vsel %vm700, %v788, %v1120
        %v1846 = vsel %vm700, %v789, %v1122
        %v1847 = vsel %vm700, %v790, %v1124
        %v1848 = vsel %vm700, %v791, %v1126
        %v1849 = vsel %vm700, %v792, %v1128
        %v1850 = vsel %vm700, %v793, %v1130
        %v1851 = vsel %vm700, %v794, %v1132
        %v1852 = vsel %vm700, %v795, %v1134
        %v1853 = vsel %vm700, %v796, %v1136
        %v1854 = vsel %vm700, %v797, %v1138
        %v1855 = vsel %vm700, %v798, %v1140
        %v1856 = vsel %vm700, %v799, %v1142
        %v1857 = vsel %vm700, %v800, %v1144
        %v1858 = vsel %vm700, %v801, %v1146
        %v1859 = vsel %vm700, %v802, %v1148
        %v1860 = vsel %vm700, %v803, %v1150
        %v1861 = vsel %vm700, %v804, %v1152
        %v1862 = vsel %vm700, %v805, %v1154
        %v1863 = vsel %vm700, %v806, %v1156
        %v1864 = vsel %vm700, %v807, %v1158
        %v1865 = vsel %vm700, %v808, %v1160
        %v1866 = vsel %vm700, %v809, %v1162
        %vm1867 = vcmask 523264
        %v1868 = vsel %vm1867, %v1835, %v1228
        %v1869 = vsel %vm1867, %v1836, %v1230
        %v1870 = vsel %vm1867, %v1837, %v1232
        %v1871 = vsel %vm1867, %v1838, %v1234
        %v1872 = vsel %vm1867, %v1839, %v1236
        %v1873 = vsel %vm1867, %v1840, %v1238
        %v1874 = vsel %vm1867, %v1841, %v1240
        %v1875 = vsel %vm1867, %v1842, %v1242
        %v1876 = vsel %vm1867, %v1843, %v1244
        %v1877 = vsel %vm1867, %v1844, %v1246
        %v1878 = vsel %vm1867, %v1845, %v1248
        %v1879 = vsel %vm1867, %v1846, %v1250
        %v1880 = vsel %vm1867, %v1847, %v1252
        %v1881 = vsel %vm1867, %v1848, %v1254
        %v1882 = vsel %vm1867, %v1849, %v1256
        %v1883 = vsel %vm1867, %v1850, %v1258
        %v1884 = vsel %vm1867, %v1851, %v1260
        %v1885 = vsel %vm1867, %v1852, %v1262
        %v1886 = vsel %vm1867, %v1853, %v1264
        %v1887 = vsel %vm1867, %v1854, %v1266
        %v1888 = vsel %vm1867, %v1855, %v1268
        %v1889 = vsel %vm1867, %v1856, %v1270
        %v1890 = vsel %vm1867, %v1857, %v1272
        %v1891 = vsel %vm1867, %v1858, %v1274
        %v1892 = vsel %vm1867, %v1859, %v1276
        %v1893 = vsel %vm1867, %v1860, %v1278
        %v1894 = vsel %vm1867, %v1861, %v1280
        %v1895 = vsel %vm1867, %v1862, %v1282
        %v1896 = vsel %vm1867, %v1863, %v1284
        %v1897 = vsel %vm1867, %v1864, %v1286
        %v1898 = vsel %vm1867, %v1865, %v1288
        %v1899 = vsel %vm1867, %v1866, %v1290
        %vm1900 = vcmask 785408
        %v1901 = vsel %vm1900, %v1868, %v1356
        %v1902 = vsel %vm1900, %v1869, %v1358
        %v1903 = vsel %vm1900, %v1870, %v1360
        %v1904 = vsel %vm1900, %v1871, %v1362
        %v1905 = vsel %vm1900, %v1872, %v1364
        %v1906 = vsel %vm1900, %v1873, %v1366
        %v1907 = vsel %vm1900, %v1874, %v1368
        %v1908 = vsel %vm1900, %v1875, %v1370
        %v1909 = vsel %vm1900, %v1876, %v1372
        %v1910 = vsel %vm1900, %v1877, %v1374
        %v1911 = vsel %vm1900, %v1878, %v1376
        %v1912 = vsel %vm1900, %v1879, %v1378
        %v1913 = vsel %vm1900, %v1880, %v1380
        %v1914 = vsel %vm1900, %v1881, %v1382
        %v1915 = vsel %vm1900, %v1882, %v1384
        %v1916 = vsel %vm1900, %v1883, %v1386
        %v1917 = vsel %vm1900, %v1884, %v1388
        %v1918 = vsel %vm1900, %v1885, %v1390
        %v1919 = vsel %vm1900, %v1886, %v1392
        %v1920 = vsel %vm1900, %v1887, %v1394
        %v1921 = vsel %vm1900, %v1888, %v1396
        %v1922 = vsel %vm1900, %v1889, %v1398
        %v1923 = vsel %vm1900, %v1890, %v1400
        %v1924 = vsel %vm1900, %v1891, %v1402
        %v1925 = vsel %vm1900, %v1892, %v1404
        %v1926 = vsel %vm1900, %v1893, %v1406
        %v1927 = vsel %vm1900, %v1894, %v1408
        %v1928 = vsel %vm1900, %v1895, %v1410
        %v1929 = vsel %vm1900, %v1896, %v1412
        %v1930 = vsel %vm1900, %v1897, %v1414
        %v1931 = vsel %vm1900, %v1898, %v1416
        %v1932 = vsel %vm1900, %v1899, %v1418
        %v1933 = vsel %vm700, %v906, %v1484
        %v1934 = vsel %vm700, %v907, %v1486
        %v1935 = vsel %vm700, %v908, %v1488
        %v1936 = vsel %vm700, %v909, %v1490
        %v1937 = vsel %vm700, %v910, %v1492
        %v1938 = vsel %vm700, %v911, %v1494
        %v1939 = vsel %vm700, %v912, %v1496
        %v1940 = vsel %vm700, %v913, %v1498
        %v1941 = vsel %vm700, %v914, %v1500
        %v1942 = vsel %vm700, %v915, %v1502
        %v1943 = vsel %vm700, %v916, %v1504
        %v1944 = vsel %vm700, %v917, %v1506
        %v1945 = vsel %vm700, %v918, %v1508
        %v1946 = vsel %vm700, %v919, %v1510
        %v1947 = vsel %vm700, %v920, %v1512
        %v1948 = vsel %vm700, %v921, %v1514
        %v1949 = vsel %vm700, %v922, %v1516
        %v1950 = vsel %vm700, %v923, %v1518
        %v1951 = vsel %vm700, %v924, %v1520
        %v1952 = vsel %vm700, %v925, %v1522
        %v1953 = vsel %vm700, %v926, %v1524
        %v1954 = vsel %vm700, %v927, %v1526
        %v1955 = vsel %vm700, %v928, %v1528
        %v1956 = vsel %vm700, %v929, %v1530
        %v1957 = vsel %vm700, %v930, %v1532
        %v1958 = vsel %vm700, %v931, %v1534
        %v1959 = vsel %vm700, %v932, %v1536
        %v1960 = vsel %vm700, %v933, %v1538
        %v1961 = vsel %vm700, %v934, %v1540
        %v1962 = vsel %vm700, %v935, %v1542
        %v1963 = vsel %vm700, %v936, %v1544
        %v1964 = vsel %vm700, %v937, %v1546
        %v1965 = vsel %vm1867, %v1933, %v1612
        %v1966 = vsel %vm1867, %v1934, %v1614
        %v1967 = vsel %vm1867, %v1935, %v1616
        %v1968 = vsel %vm1867, %v1936, %v1618
        %v1969 = vsel %vm1867, %v1937, %v1620
        %v1970 = vsel %vm1867, %v1938, %v1622
        %v1971 = vsel %vm1867, %v1939, %v1624
        %v1972 = vsel %vm1867, %v1940, %v1626
        %v1973 = vsel %vm1867, %v1941, %v1628
        %v1974 = vsel %vm1867, %v1942, %v1630
        %v1975 = vsel %vm1867, %v1943, %v1632
        %v1976 = vsel %vm1867, %v1944, %v1634
        %v1977 = vsel %vm1867, %v1945, %v1636
        %v1978 = vsel %vm1867, %v1946, %v1638
        %v1979 = vsel %vm1867, %v1947, %v1640
        %v1980 = vsel %vm1867, %v1948, %v1642
        %v1981 = vsel %vm1867, %v1949, %v1644
        %v1982 = vsel %vm1867, %v1950, %v1646
        %v1983 = vsel %vm1867, %v1951, %v1648
        %v1984 = vsel %vm1867, %v1952, %v1650
        %v1985 = vsel %vm1867, %v1953, %v1652
        %v1986 = vsel %vm1867, %v1954, %v1654
        %v1987 = vsel %vm1867, %v1955, %v1656
        %v1988 = vsel %vm1867, %v1956, %v1658
        %v1989 = vsel %vm1867, %v1957, %v1660
        %v1990 = vsel %vm1867, %v1958, %v1662
        %v1991 = vsel %vm1867, %v1959, %v1664
        %v1992 = vsel %vm1867, %v1960, %v1666
        %v1993 = vsel %vm1867, %v1961, %v1668
        %v1994 = vsel %vm1867, %v1962, %v1670
        %v1995 = vsel %vm1867, %v1963, %v1672
        %v1996 = vsel %vm1867, %v1964, %v1674
        %v1997 = vsel %vm1900, %v1965, %v1740
        %v1998 = vsel %vm1900, %v1966, %v1742
        %v1999 = vsel %vm1900, %v1967, %v1744
        %v2000 = vsel %vm1900, %v1968, %v1746
        %v2001 = vsel %vm1900, %v1969, %v1748
        %v2002 = vsel %vm1900, %v1970, %v1750
        %v2003 = vsel %vm1900, %v1971, %v1752
        %v2004 = vsel %vm1900, %v1972, %v1754
        %v2005 = vsel %vm1900, %v1973, %v1756
        %v2006 = vsel %vm1900, %v1974, %v1758
        %v2007 = vsel %vm1900, %v1975, %v1760
        %v2008 = vsel %vm1900, %v1976, %v1762
        %v2009 = vsel %vm1900, %v1977, %v1764
        %v2010 = vsel %vm1900, %v1978, %v1766
        %v2011 = vsel %vm1900, %v1979, %v1768
        %v2012 = vsel %vm1900, %v1980, %v1770
        %v2013 = vsel %vm1900, %v1981, %v1772
        %v2014 = vsel %vm1900, %v1982, %v1774
        %v2015 = vsel %vm1900, %v1983, %v1776
        %v2016 = vsel %vm1900, %v1984, %v1778
        %v2017 = vsel %vm1900, %v1985, %v1780
        %v2018 = vsel %vm1900, %v1986, %v1782
        %v2019 = vsel %vm1900, %v1987, %v1784
        %v2020 = vsel %vm1900, %v1988, %v1786
        %v2021 = vsel %vm1900, %v1989, %v1788
        %v2022 = vsel %vm1900, %v1990, %v1790
        %v2023 = vsel %vm1900, %v1991, %v1792
        %v2024 = vsel %vm1900, %v1992, %v1794
        %v2025 = vsel %vm1900, %v1993, %v1796
        %v2026 = vsel %vm1900, %v1994, %v1798
        %v2027 = vsel %vm1900, %v1995, %v1800
        %v2028 = vsel %vm1900, %v1996, %v1802
        %v2029 = vld [vmem:[%s3] sm:$0xff]
        %v2030 = vld [vmem:[%s3 + $0x8] sm:$0xff]
        %v2031 = vld [vmem:[%s3 + $0x10] sm:$0xff]
        %v2032 = vld [vmem:[%s3 + $0x18] sm:$0xff]
        %v2033 = vld [vmem:[%s3 + $0x20] sm:$0xff]
        %v2034 = vld [vmem:[%s3 + $0x28] sm:$0xff]
        %v2035 = vld [vmem:[%s3 + $0x30] sm:$0xff]
        %v2036 = vld [vmem:[%s3 + $0x38] sm:$0xff]
        %v2037 = vld [vmem:[%s3 + $0x40] sm:$0xff]
        %v2038 = vld [vmem:[%s3 + $0x48] sm:$0xff]
        %v2039 = vld [vmem:[%s3 + $0x50] sm:$0xff]
        %v2040 = vld [vmem:[%s3 + $0x58] sm:$0xff]
        %v2041 = vld [vmem:[%s3 + $0x60] sm:$0xff]
        %v2042 = vld [vmem:[%s3 + $0x68] sm:$0xff]
        %v2043 = vld [vmem:[%s3 + $0x70] sm:$0xff]
        %v2044 = vld [vmem:[%s3 + $0x78] sm:$0xff]
        %v2045 = vld [vmem:[%s3 + $0x80] sm:$0xff]
        %v2046 = vld [vmem:[%s3 + $0x88] sm:$0xff]
        %v2047 = vld [vmem:[%s3 + $0x90] sm:$0xff]
        %v2048 = vld [vmem:[%s3 + $0x98] sm:$0xff]
        %v2049 = vld [vmem:[%s3 + $0xa0] sm:$0xff]
        %v2050 = vld [vmem:[%s3 + $0xa8] sm:$0xff]
        %v2051 = vld [vmem:[%s3 + $0xb0] sm:$0xff]
        %v2052 = vld [vmem:[%s3 + $0xb8] sm:$0xff]
        %v2053 = vld [vmem:[%s3 + $0xc0] sm:$0xff]
        %v2054 = vld [vmem:[%s3 + $0xc8] sm:$0xff]
        %v2055 = vld [vmem:[%s3 + $0xd0] sm:$0xff]
        %v2056 = vld [vmem:[%s3 + $0xd8] sm:$0xff]
        %v2057 = vld [vmem:[%s3 + $0xe0] sm:$0xff]
        %v2058 = vld [vmem:[%s3 + $0xe8] sm:$0xff]
        %v2059 = vld [vmem:[%s3 + $0xf0] sm:$0xff]
        %v2060 = vld [vmem:[%s3 + $0xf8] sm:$0xff]
        %v2061 = vld [vmem:[%s3 + $0x100] sm:$0xff]
        %v2062 = vld [vmem:[%s3 + $0x108] sm:$0xff]
        %v2063 = vld [vmem:[%s3 + $0x110] sm:$0xff]
        %v2064 = vld [vmem:[%s3 + $0x118] sm:$0xff]
        %v2065 = vld [vmem:[%s4] sm:$0x1]
        %v2067 = vlaneseq
        %v2068 = vshrl.u32 %v2067, 7
        %v2069 = vsub.s32 0, %v2068
        %v2070 = vrot.slane %v2065, %v2069
        %v2073 = vsel %vm700, %v1035, 0
        %v2076 = vsel %vm700, %v1036, 0
        %v2079 = vsel %vm700, %v1037, 0
        %v2082 = vsel %vm700, %v1038, 0
        %v2085 = vsel %vm700, %v1039, 0
        %v2088 = vsel %vm700, %v1040, 0
        %v2091 = vsel %vm700, %v1041, 0
        %v2094 = vsel %vm700, %v1042, 0
        %v2097 = vsel %vm700, %v1043, 0
        %v2100 = vsel %vm700, %v1044, 0
        %v2103 = vsel %vm700, %v1045, 0
        %v2106 = vsel %vm700, %v1046, 0
        %v2109 = vsel %vm700, %v1047, 0
        %v2112 = vsel %vm700, %v1048, 0
        %v2115 = vsel %vm700, %v1049, 0
        %v2118 = vsel %vm700, %v1050, 0
        %v2121 = vsel %vm700, %v1051, 0
        %v2124 = vsel %vm700, %v1052, 0
        %v2127 = vsel %vm700, %v1053, 0
        %v2130 = vsel %vm700, %v1054, 0
        %v2133 = vsel %vm700, %v1055, 0
        %v2136 = vsel %vm700, %v1056, 0
        %v2139 = vsel %vm700, %v1057, 0
        %v2142 = vsel %vm700, %v1058, 0
        %v2145 = vsel %vm700, %v1059, 0
        %v2148 = vsel %vm700, %v1060, 0
        %v2151 = vsel %vm700, %v1061, 0
        %v2154 = vsel %vm700, %v1062, 0
        %v2157 = vsel %vm700, %v1063, 0
        %v2160 = vsel %vm700, %v1064, 0
        %v2163 = vsel %vm700, %v1065, 0
        %v2166 = vsel %vm700, %v1066, 0
        %2168 = vmatprep.subr.mxu0 0.0
        %2169 = vmatpush1.msra.mxu0 %v2029
        %2170 = vmatprep.subr.mxu0 0.0
        %2171 = vmatpush1.msra.mxu0 %v2030
        %2172 = vmatprep.subr.mxu0 0.0
        %2173 = vmatpush1.msra.mxu0 %v2031
        %2174 = vmatprep.subr.mxu0 0.0
        %2175 = vmatpush1.msra.mxu0 %v2032
        %2176 = vmatprep.subr.mxu0 0.0
        %2177 = vmatpush1.msra.mxu0 %v2033
        %2178 = vmatprep.subr.mxu0 0.0
        %2179 = vmatpush1.msra.mxu0 %v2034
        %2180 = vmatprep.subr.mxu0 0.0
        %2181 = vmatpush1.msra.mxu0 %v2035
        %2182 = vmatprep.subr.mxu0 0.0
        %2183 = vmatpush1.msra.mxu0 %v2036
        %2184 = vmatprep.subr.mxu0 0.0
        %2185 = vmatpush1.msra.mxu0 %v2037
        %2186 = vmatprep.subr.mxu0 0.0
        %2187 = vmatpush1.msra.mxu0 %v2038
        %2188 = vmatprep.subr.mxu0 0.0
        %2189 = vmatpush1.msra.mxu0 %v2039
        %2190 = vmatprep.subr.mxu0 0.0
        %2191 = vmatpush1.msra.mxu0 %v2040
        %2192 = vmatprep.subr.mxu0 0.0
        %2193 = vmatpush1.msra.mxu0 %v2041
        %2194 = vmatprep.subr.mxu0 0.0
        %2195 = vmatpush1.msra.mxu0 %v2042
        %2196 = vmatprep.subr.mxu0 0.0
        %2197 = vmatpush1.msra.mxu0 %v2043
        %2198 = vmatprep.subr.mxu0 0.0
        %2199 = vmatpush1.msra.mxu0 %v2044
        %2200 = vmatprep.subr.mxu0 0.0
        %2201 = vmatpush1.msra.mxu0 %v2045
        %2202 = vmatprep.subr.mxu0 0.0
        %2203 = vmatpush1.msra.mxu0 %v2046
        %2204 = vmatprep.subr.mxu0 0.0
        %2205 = vmatpush1.msra.mxu0 %v2047
        %2206 = vmatprep.subr.mxu0 0.0
        %2207 = vmatpush1.msra.mxu0 %v2048
        %2208 = vmatprep.subr.mxu0 0.0
        %2209 = vmatpush1.msra.mxu0 %v2049
        %2210 = vmatprep.subr.mxu0 0.0
        %2211 = vmatpush1.msra.mxu0 %v2050
        %2212 = vmatprep.subr.mxu0 0.0
        %2213 = vmatpush1.msra.mxu0 %v2051
        %2214 = vmatprep.subr.mxu0 0.0
        %2215 = vmatpush1.msra.mxu0 %v2052
        %2216 = vmatprep.subr.mxu0 0.0
        %2217 = vmatpush1.msra.mxu0 %v2053
        %2218 = vmatprep.subr.mxu0 0.0
        %2219 = vmatpush1.msra.mxu0 %v2054
        %2220 = vmatprep.subr.mxu0 0.0
        %2221 = vmatpush1.msra.mxu0 %v2055
        %2222 = vmatprep.subr.mxu0 0.0
        %2223 = vmatpush1.msra.mxu0 %v2056
        %2224 = vmatprep.subr.mxu0 0.0
        %2225 = vmatpush1.msra.mxu0 %v2057
        %2226 = vmatprep.subr.mxu0 0.0
        %2227 = vmatpush1.msra.mxu0 %v2058
        %2228 = vmatprep.subr.mxu0 0.0
        %2229 = vmatpush1.msra.mxu0 %v2059
        %2230 = vmatprep.subr.mxu0 0.0
        %2231 = vmatpush1.msra.mxu0 %v2060
        %2232 = vmatprep.mubr.f32.mxu0 %v1997
        %2233 = vmatmul.mubr.f32.gmra.mrb[0].mxu0 %v1901
        %v2234 = vpop.f32.mrb[0].mxu0
        %v2235 = vadd.f32 %v2070, %v2234
        %v2236 = vpop.f32.mrb[0].mxu0
        %2237 = vmatprep.mubr.f32.mxu0 %v1998
        %2238 = vmatmul.mubr.f32.gmra.mrb[0].mxu0 %v1902
        %v2239 = vpop.f32.mrb[0].mxu0
        %v2240 = vadd.f32 %v2070, %v2239
        %v2241 = vpop.f32.mrb[0].mxu0
        %2242 = vmatprep.mubr.f32.mxu0 %v1999
        %2243 = vmatmul.mubr.f32.gmra.mrb[0].mxu0 %v1903
        %v2244 = vpop.f32.mrb[0].mxu0
        %v2245 = vadd.f32 %v2070, %v2244
        %v2246 = vpop.f32.mrb[0].mxu0
        %2247 = vmatprep.mubr.f32.mxu0 %v2000
        %2248 = vmatmul.mubr.f32.gmra.mrb[0].mxu0 %v1904
        %v2249 = vpop.f32.mrb[0].mxu0
        %v2250 = vadd.f32 %v2070, %v2249
        %v2251 = vpop.f32.mrb[0].mxu0
        %2252 = vmatprep.mubr.f32.mxu0 %v2001
        %2253 = vmatmul.mubr.f32.gmra.mrb[0].mxu0 %v1905
        %v2254 = vpop.f32.mrb[0].mxu0
        %v2255 = vadd.f32 %v2070, %v2254
        %v2256 = vpop.f32.mrb[0].mxu0
        %2257 = vmatprep.mubr.f32.mxu0 %v2002
        %2258 = vmatmul.mubr.f32.gmra.mrb[0].mxu0 %v1906
        %v2259 = vpop.f32.mrb[0].mxu0
        %v2260 = vadd.f32 %v2070, %v2259
        %v2261 = vpop.f32.mrb[0].mxu0
        %2262 = vmatprep.mubr.f32.mxu0 %v2003
        %2263 = vmatmul.mubr.f32.gmra.mrb[0].mxu0 %v1907
        %v2264 = vpop.f32.mrb[0].mxu0
        %v2265 = vadd.f32 %v2070, %v2264
        %v2266 = vpop.f32.mrb[0].mxu0
        %2267 = vmatprep.mubr.f32.mxu0 %v2004
        %2268 = vmatmul.mubr.f32.gmra.mrb[0].mxu0 %v1908
        %v2269 = vpop.f32.mrb[0].mxu0
        %v2270 = vadd.f32 %v2070, %v2269
        %v2271 = vpop.f32.mrb[0].mxu0
        %2272 = vmatprep.mubr.f32.mxu0 %v2005
        %2273 = vmatmul.mubr.f32.gmra.mrb[0].mxu0 %v1909
        %v2274 = vpop.f32.mrb[0].mxu0
        %v2275 = vadd.f32 %v2070, %v2274
        %v2276 = vpop.f32.mrb[0].mxu0
        %2277 = vmatprep.mubr.f32.mxu0 %v2006
        %2278 = vmatmul.mubr.f32.gmra.mrb[0].mxu0 %v1910
        %v2279 = vpop.f32.mrb[0].mxu0
        %v2280 = vadd.f32 %v2070, %v2279
        %v2281 = vpop.f32.mrb[0].mxu0
        %2282 = vmatprep.mubr.f32.mxu0 %v2007
        %2283 = vmatmul.mubr.f32.gmra.mrb[0].mxu0 %v1911
        %v2284 = vpop.f32.mrb[0].mxu0
        %v2285 = vadd.f32 %v2070, %v2284
        %v2286 = vpop.f32.mrb[0].mxu0
        %2287 = vmatprep.mubr.f32.mxu0 %v2008
        %2288 = vmatmul.mubr.f32.gmra.mrb[0].mxu0 %v1912
        %v2289 = vpop.f32.mrb[0].mxu0
        %v2290 = vadd.f32 %v2070, %v2289
        %v2291 = vpop.f32.mrb[0].mxu0
        %2292 = vmatprep.mubr.f32.mxu0 %v2009
        %2293 = vmatmul.mubr.f32.gmra.mrb[0].mxu0 %v1913
        %v2294 = vpop.f32.mrb[0].mxu0
        %v2295 = vadd.f32 %v2070, %v2294
        %v2296 = vpop.f32.mrb[0].mxu0
        %2297 = vmatprep.mubr.f32.mxu0 %v2010
        %2298 = vmatmul.mubr.f32.gmra.mrb[0].mxu0 %v1914
        %v2299 = vpop.f32.mrb[0].mxu0
        %v2300 = vadd.f32 %v2070, %v2299
        %v2301 = vpop.f32.mrb[0].mxu0
        %2302 = vmatprep.mubr.f32.mxu0 %v2011
        %2303 = vmatmul.mubr.f32.gmra.mrb[0].mxu0 %v1915
        %v2304 = vpop.f32.mrb[0].mxu0
        %v2305 = vadd.f32 %v2070, %v2304
        %v2306 = vpop.f32.mrb[0].mxu0
        %2307 = vmatprep.mubr.f32.mxu0 %v2012
        %2308 = vmatmul.mubr.f32.gmra.mrb[0].mxu0 %v1916
        %v2309 = vpop.f32.mrb[0].mxu0
        %v2310 = vadd.f32 %v2070, %v2309
        %v2311 = vpop.f32.mrb[0].mxu0
        %2312 = vmatprep.mubr.f32.mxu0 %v2013
        %2313 = vmatmul.mubr.f32.gmra.mrb[0].mxu0 %v1917
        %v2314 = vpop.f32.mrb[0].mxu0
        %v2315 = vadd.f32 %v2070, %v2314
        %v2316 = vpop.f32.mrb[0].mxu0
        %2317 = vmatprep.mubr.f32.mxu0 %v2014
        %2318 = vmatmul.mubr.f32.gmra.mrb[0].mxu0 %v1918
        %v2319 = vpop.f32.mrb[0].mxu0
        %v2320 = vadd.f32 %v2070, %v2319
        %v2321 = vpop.f32.mrb[0].mxu0
        %2322 = vmatprep.mubr.f32.mxu0 %v2015
        %2323 = vmatmul.mubr.f32.gmra.mrb[0].mxu0 %v1919
        %v2324 = vpop.f32.mrb[0].mxu0
        %v2325 = vadd.f32 %v2070, %v2324
        %v2326 = vpop.f32.mrb[0].mxu0
        %2327 = vmatprep.mubr.f32.mxu0 %v2016
        %2328 = vmatmul.mubr.f32.gmra.mrb[0].mxu0 %v1920
        %v2329 = vpop.f32.mrb[0].mxu0
        %v2330 = vadd.f32 %v2070, %v2329
        %v2331 = vpop.f32.mrb[0].mxu0
        %2332 = vmatprep.mubr.f32.mxu0 %v2017
        %2333 = vmatmul.mubr.f32.gmra.mrb[0].mxu0 %v1921
        %v2334 = vpop.f32.mrb[0].mxu0
        %v2335 = vadd.f32 %v2070, %v2334
        %v2336 = vpop.f32.mrb[0].mxu0
        %2337 = vmatprep.mubr.f32.mxu0 %v2018
        %2338 = vmatmul.mubr.f32.gmra.mrb[0].mxu0 %v1922
        %v2339 = vpop.f32.mrb[0].mxu0
        %v2340 = vadd.f32 %v2070, %v2339
        %v2341 = vpop.f32.mrb[0].mxu0
        %2342 = vmatprep.mubr.f32.mxu0 %v2019
        %2343 = vmatmul.mubr.f32.gmra.mrb[0].mxu0 %v1923
        %v2344 = vpop.f32.mrb[0].mxu0
        %v2345 = vadd.f32 %v2070, %v2344
        %v2346 = vpop.f32.mrb[0].mxu0
        %2347 = vmatprep.mubr.f32.mxu0 %v2020
        %2348 = vmatmul.mubr.f32.gmra.mrb[0].mxu0 %v1924
        %v2349 = vpop.f32.mrb[0].mxu0
        %v2350 = vadd.f32 %v2070, %v2349
        %v2351 = vpop.f32.mrb[0].mxu0
        %2352 = vmatprep.mubr.f32.mxu0 %v2021
        %2353 = vmatmul.mubr.f32.gmra.mrb[0].mxu0 %v1925
        %v2354 = vpop.f32.mrb[0].mxu0
        %v2355 = vadd.f32 %v2070, %v2354
        %v2356 = vpop.f32.mrb[0].mxu0
        %2357 = vmatprep.mubr.f32.mxu0 %v2022
        %2358 = vmatmul.mubr.f32.gmra.mrb[0].mxu0 %v1926
        %v2359 = vpop.f32.mrb[0].mxu0
        %v2360 = vadd.f32 %v2070, %v2359
        %v2361 = vpop.f32.mrb[0].mxu0
        %2362 = vmatprep.mubr.f32.mxu0 %v2023
        %2363 = vmatmul.mubr.f32.gmra.mrb[0].mxu0 %v1927
        %v2364 = vpop.f32.mrb[0].mxu0
        %v2365 = vadd.f32 %v2070, %v2364
        %v2366 = vpop.f32.mrb[0].mxu0
        %2367 = vmatprep.mubr.f32.mxu0 %v2024
        %2368 = vmatmul.mubr.f32.gmra.mrb[0].mxu0 %v1928
        %v2369 = vpop.f32.mrb[0].mxu0
        %v2370 = vadd.f32 %v2070, %v2369
        %v2371 = vpop.f32.mrb[0].mxu0
        %2372 = vmatprep.mubr.f32.mxu0 %v2025
        %2373 = vmatmul.mubr.f32.gmra.mrb[0].mxu0 %v1929
        %v2374 = vpop.f32.mrb[0].mxu0
        %v2375 = vadd.f32 %v2070, %v2374
        %v2376 = vpop.f32.mrb[0].mxu0
        %2377 = vmatprep.mubr.f32.mxu0 %v2026
        %2378 = vmatmul.mubr.f32.gmra.mrb[0].mxu0 %v1930
        %v2379 = vpop.f32.mrb[0].mxu0
        %v2380 = vadd.f32 %v2070, %v2379
        %v2381 = vpop.f32.mrb[0].mxu0
        %2382 = vmatprep.mubr.f32.mxu0 %v2027
        %2383 = vmatmul.mubr.f32.gmra.mrb[0].mxu0 %v1931
        %v2384 = vpop.f32.mrb[0].mxu0
        %v2385 = vadd.f32 %v2070, %v2384
        %v2386 = vpop.f32.mrb[0].mxu0
        %2387 = vmatprep.mubr.f32.mxu0 %v2028
        %2388 = vmatmul.mubr.f32.gmra.mrb[0].mxu0 %v1932
        %v2389 = vpop.f32.mrb[0].mxu0
        %v2390 = vadd.f32 %v2070, %v2389
        %v2391 = vpop.f32.mrb[0].mxu0
        %2392 = vdwg.mxu0
        %2393 = vmatprep.subr.mxu0 0.0
        %2394 = vmatpush1.msra.mxu0 %v2061
        %2395 = vmatprep.subr.mxu0 0.0
        %2396 = vmatpush1.msra.mxu0 %v2062
        %2397 = vmatprep.subr.mxu0 0.0
        %2398 = vmatpush1.msra.mxu0 %v2063
        %2399 = vmatprep.subr.mxu0 0.0
        %2400 = vmatpush1.msra.mxu0 %v2064
        %2401 = vmatprep.subr.mxu0 0.0
        %2402 = vmatpush1.msra.mxu0 0.0
        %2403 = vmatprep.subr.mxu0 0.0
        %2404 = vmatpush1.msra.mxu0 0.0
        %2405 = vmatprep.subr.mxu0 0.0
        %2406 = vmatpush1.msra.mxu0 0.0
        %2407 = vmatprep.subr.mxu0 0.0
        %2408 = vmatpush1.msra.mxu0 0.0
        %2409 = vmatprep.subr.mxu0 0.0
        %2410 = vmatpush1.msra.mxu0 0.0
        %2411 = vmatprep.subr.mxu0 0.0
        %2412 = vmatpush1.msra.mxu0 0.0
        %2413 = vmatprep.subr.mxu0 0.0
        %2414 = vmatpush1.msra.mxu0 0.0
        %2415 = vmatprep.subr.mxu0 0.0
        %2416 = vmatpush1.msra.mxu0 0.0
        %2417 = vmatprep.subr.mxu0 0.0
        %2418 = vmatpush1.msra.mxu0 0.0
        %2419 = vmatprep.subr.mxu0 0.0
        %2420 = vmatpush1.msra.mxu0 0.0
        %2421 = vmatprep.subr.mxu0 0.0
        %2422 = vmatpush1.msra.mxu0 0.0
        %2423 = vmatprep.subr.mxu0 0.0
        %2424 = vmatpush1.msra.mxu0 0.0
        %2425 = vmatprep.subr.mxu0 0.0
        %2426 = vmatpush1.msra.mxu0 0.0
        %2427 = vmatprep.subr.mxu0 0.0
        %2428 = vmatpush1.msra.mxu0 0.0
        %2429 = vmatprep.subr.mxu0 0.0
        %2430 = vmatpush1.msra.mxu0 0.0
        %2431 = vmatprep.subr.mxu0 0.0
        %2432 = vmatpush1.msra.mxu0 0.0
        %2433 = vmatprep.subr.mxu0 0.0
        %2434 = vmatpush1.msra.mxu0 0.0
        %2435 = vmatprep.subr.mxu0 0.0
        %2436 = vmatpush1.msra.mxu0 0.0
        %2437 = vmatprep.subr.mxu0 0.0
        %2438 = vmatpush1.msra.mxu0 0.0
        %2439 = vmatprep.subr.mxu0 0.0
        %2440 = vmatpush1.msra.mxu0 0.0
        %2441 = vmatprep.subr.mxu0 0.0
        %2442 = vmatpush1.msra.mxu0 0.0
        %2443 = vmatprep.subr.mxu0 0.0
        %2444 = vmatpush1.msra.mxu0 0.0
        %2445 = vmatprep.subr.mxu0 0.0
        %2446 = vmatpush1.msra.mxu0 0.0
        %2447 = vmatprep.subr.mxu0 0.0
        %2448 = vmatpush1.msra.mxu0 0.0
        %2449 = vmatprep.subr.mxu0 0.0
        %2450 = vmatpush1.msra.mxu0 0.0
        %2451 = vmatprep.subr.mxu0 0.0
        %2452 = vmatpush1.msra.mxu0 0.0
        %2453 = vmatprep.subr.mxu0 0.0
        %2454 = vmatpush1.msra.mxu0 0.0
        %2455 = vmatprep.subr.mxu0 0.0
        %2456 = vmatpush1.msra.mxu0 0.0
        %2457 = vmatprep.mubr.f32.mxu0 0.0
        %2458 = vmatmul.mubr.f32.gmra.mrb[0].mxu0 %v2073
        %v2459 = vpop.f32.mrb[0].mxu0
        %v2460 = vadd.f32 %v2235, %v2459
        %v2461 = vpop.f32.mrb[0].mxu0
        %2462 = vmatprep.mubr.f32.mxu0 0.0
        %2463 = vmatmul.mubr.f32.gmra.mrb[0].mxu0 %v2076
        %v2464 = vpop.f32.mrb[0].mxu0
        %v2465 = vadd.f32 %v2240, %v2464
        %v2466 = vpop.f32.mrb[0].mxu0
        %2467 = vmatprep.mubr.f32.mxu0 0.0
        %2468 = vmatmul.mubr.f32.gmra.mrb[0].mxu0 %v2079
        %v2469 = vpop.f32.mrb[0].mxu0
        %v2470 = vadd.f32 %v2245, %v2469
        %v2471 = vpop.f32.mrb[0].mxu0
        %2472 = vmatprep.mubr.f32.mxu0 0.0
        %2473 = vmatmul.mubr.f32.gmra.mrb[0].mxu0 %v2082
        %v2474 = vpop.f32.mrb[0].mxu0
        %v2475 = vadd.f32 %v2250, %v2474
        %v2476 = vpop.f32.mrb[0].mxu0
        %2477 = vmatprep.mubr.f32.mxu0 0.0
        %2478 = vmatmul.mubr.f32.gmra.mrb[0].mxu0 %v2085
        %v2479 = vpop.f32.mrb[0].mxu0
        %v2480 = vadd.f32 %v2255, %v2479
        %v2481 = vpop.f32.mrb[0].mxu0
        %2482 = vmatprep.mubr.f32.mxu0 0.0
        %2483 = vmatmul.mubr.f32.gmra.mrb[0].mxu0 %v2088
        %v2484 = vpop.f32.mrb[0].mxu0
        %v2485 = vadd.f32 %v2260, %v2484
        %v2486 = vpop.f32.mrb[0].mxu0
        %2487 = vmatprep.mubr.f32.mxu0 0.0
        %2488 = vmatmul.mubr.f32.gmra.mrb[0].mxu0 %v2091
        %v2489 = vpop.f32.mrb[0].mxu0
        %v2490 = vadd.f32 %v2265, %v2489
        %v2491 = vpop.f32.mrb[0].mxu0
        %2492 = vmatprep.mubr.f32.mxu0 0.0
        %2493 = vmatmul.mubr.f32.gmra.mrb[0].mxu0 %v2094
        %v2494 = vpop.f32.mrb[0].mxu0
        %v2495 = vadd.f32 %v2270, %v2494
        %v2496 = vpop.f32.mrb[0].mxu0
        %2497 = vmatprep.mubr.f32.mxu0 0.0
        %2498 = vmatmul.mubr.f32.gmra.mrb[0].mxu0 %v2097
        %v2499 = vpop.f32.mrb[0].mxu0
        %v2500 = vadd.f32 %v2275, %v2499
        %v2501 = vpop.f32.mrb[0].mxu0
        %2502 = vmatprep.mubr.f32.mxu0 0.0
        %2503 = vmatmul.mubr.f32.gmra.mrb[0].mxu0 %v2100
        %v2504 = vpop.f32.mrb[0].mxu0
        %v2505 = vadd.f32 %v2280, %v2504
        %v2506 = vpop.f32.mrb[0].mxu0
        %2507 = vmatprep.mubr.f32.mxu0 0.0
        %2508 = vmatmul.mubr.f32.gmra.mrb[0].mxu0 %v2103
        %v2509 = vpop.f32.mrb[0].mxu0
        %v2510 = vadd.f32 %v2285, %v2509
        %v2511 = vpop.f32.mrb[0].mxu0
        %2512 = vmatprep.mubr.f32.mxu0 0.0
        %2513 = vmatmul.mubr.f32.gmra.mrb[0].mxu0 %v2106
        %v2514 = vpop.f32.mrb[0].mxu0
        %v2515 = vadd.f32 %v2290, %v2514
        %v2516 = vpop.f32.mrb[0].mxu0
        %2517 = vmatprep.mubr.f32.mxu0 0.0
        %2518 = vmatmul.mubr.f32.gmra.mrb[0].mxu0 %v2109
        %v2519 = vpop.f32.mrb[0].mxu0
        %v2520 = vadd.f32 %v2295, %v2519
        %v2521 = vpop.f32.mrb[0].mxu0
        %2522 = vmatprep.mubr.f32.mxu0 0.0
        %2523 = vmatmul.mubr.f32.gmra.mrb[0].mxu0 %v2112
        %v2524 = vpop.f32.mrb[0].mxu0
        %v2525 = vadd.f32 %v2300, %v2524
        %v2526 = vpop.f32.mrb[0].mxu0
        %2527 = vmatprep.mubr.f32.mxu0 0.0
        %2528 = vmatmul.mubr.f32.gmra.mrb[0].mxu0 %v2115
        %v2529 = vpop.f32.mrb[0].mxu0
        %v2530 = vadd.f32 %v2305, %v2529
        %v2531 = vpop.f32.mrb[0].mxu0
        %2532 = vmatprep.mubr.f32.mxu0 0.0
        %2533 = vmatmul.mubr.f32.gmra.mrb[0].mxu0 %v2118
        %v2534 = vpop.f32.mrb[0].mxu0
        %v2535 = vadd.f32 %v2310, %v2534
        %v2536 = vpop.f32.mrb[0].mxu0
        %2537 = vmatprep.mubr.f32.mxu0 0.0
        %2538 = vmatmul.mubr.f32.gmra.mrb[0].mxu0 %v2121
        %v2539 = vpop.f32.mrb[0].mxu0
        %v2540 = vadd.f32 %v2315, %v2539
        %v2541 = vpop.f32.mrb[0].mxu0
        %2542 = vmatprep.mubr.f32.mxu0 0.0
        %2543 = vmatmul.mubr.f32.gmra.mrb[0].mxu0 %v2124
        %v2544 = vpop.f32.mrb[0].mxu0
        %v2545 = vadd.f32 %v2320, %v2544
        %v2546 = vpop.f32.mrb[0].mxu0
        %2547 = vmatprep.mubr.f32.mxu0 0.0
        %2548 = vmatmul.mubr.f32.gmra.mrb[0].mxu0 %v2127
        %v2549 = vpop.f32.mrb[0].mxu0
        %v2550 = vadd.f32 %v2325, %v2549
        %v2551 = vpop.f32.mrb[0].mxu0
        %2552 = vmatprep.mubr.f32.mxu0 0.0
        %2553 = vmatmul.mubr.f32.gmra.mrb[0].mxu0 %v2130
        %v2554 = vpop.f32.mrb[0].mxu0
        %v2555 = vadd.f32 %v2330, %v2554
        %v2556 = vpop.f32.mrb[0].mxu0
        %2557 = vmatprep.mubr.f32.mxu0 0.0
        %2558 = vmatmul.mubr.f32.gmra.mrb[0].mxu0 %v2133
        %v2559 = vpop.f32.mrb[0].mxu0
        %v2560 = vadd.f32 %v2335, %v2559
        %v2561 = vpop.f32.mrb[0].mxu0
        %2562 = vmatprep.mubr.f32.mxu0 0.0
        %2563 = vmatmul.mubr.f32.gmra.mrb[0].mxu0 %v2136
        %v2564 = vpop.f32.mrb[0].mxu0
        %v2565 = vadd.f32 %v2340, %v2564
        %v2566 = vpop.f32.mrb[0].mxu0
        %2567 = vmatprep.mubr.f32.mxu0 0.0
        %2568 = vmatmul.mubr.f32.gmra.mrb[0].mxu0 %v2139
        %v2569 = vpop.f32.mrb[0].mxu0
        %v2570 = vadd.f32 %v2345, %v2569
        %v2571 = vpop.f32.mrb[0].mxu0
        %2572 = vmatprep.mubr.f32.mxu0 0.0
        %2573 = vmatmul.mubr.f32.gmra.mrb[0].mxu0 %v2142
        %v2574 = vpop.f32.mrb[0].mxu0
        %v2575 = vadd.f32 %v2350, %v2574
        %v2576 = vpop.f32.mrb[0].mxu0
        %2577 = vmatprep.mubr.f32.mxu0 0.0
        %2578 = vmatmul.mubr.f32.gmra.mrb[0].mxu0 %v2145
        %v2579 = vpop.f32.mrb[0].mxu0
        %v2580 = vadd.f32 %v2355, %v2579
        %v2581 = vpop.f32.mrb[0].mxu0
        %2582 = vmatprep.mubr.f32.mxu0 0.0
        %2583 = vmatmul.mubr.f32.gmra.mrb[0].mxu0 %v2148
        %v2584 = vpop.f32.mrb[0].mxu0
        %v2585 = vadd.f32 %v2360, %v2584
        %v2586 = vpop.f32.mrb[0].mxu0
        %2587 = vmatprep.mubr.f32.mxu0 0.0
        %2588 = vmatmul.mubr.f32.gmra.mrb[0].mxu0 %v2151
        %v2589 = vpop.f32.mrb[0].mxu0
        %v2590 = vadd.f32 %v2365, %v2589
        %v2591 = vpop.f32.mrb[0].mxu0
        %2592 = vmatprep.mubr.f32.mxu0 0.0
        %2593 = vmatmul.mubr.f32.gmra.mrb[0].mxu0 %v2154
        %v2594 = vpop.f32.mrb[0].mxu0
        %v2595 = vadd.f32 %v2370, %v2594
        %v2596 = vpop.f32.mrb[0].mxu0
        %2597 = vmatprep.mubr.f32.mxu0 0.0
        %2598 = vmatmul.mubr.f32.gmra.mrb[0].mxu0 %v2157
        %v2599 = vpop.f32.mrb[0].mxu0
        %v2600 = vadd.f32 %v2375, %v2599
        %v2601 = vpop.f32.mrb[0].mxu0
        %2602 = vmatprep.mubr.f32.mxu0 0.0
        %2603 = vmatmul.mubr.f32.gmra.mrb[0].mxu0 %v2160
        %v2604 = vpop.f32.mrb[0].mxu0
        %v2605 = vadd.f32 %v2380, %v2604
        %v2606 = vpop.f32.mrb[0].mxu0
        %2607 = vmatprep.mubr.f32.mxu0 0.0
        %2608 = vmatmul.mubr.f32.gmra.mrb[0].mxu0 %v2163
        %v2609 = vpop.f32.mrb[0].mxu0
        %v2610 = vadd.f32 %v2385, %v2609
        %v2611 = vpop.f32.mrb[0].mxu0
        %2612 = vmatprep.mubr.f32.mxu0 0.0
        %2613 = vmatmul.mubr.f32.gmra.mrb[0].mxu0 %v2166
        %v2614 = vpop.f32.mrb[0].mxu0
        %v2615 = vadd.f32 %v2390, %v2614
        %v2616 = vpop.f32.mrb[0].mxu0
        %2617 = vdwg.mxu0
        %v2618 = vmax.f32 %v2460, 0.0
        %v2619 = vmax.f32 %v2465, 0.0
        %v2620 = vmax.f32 %v2470, 0.0
        %v2621 = vmax.f32 %v2475, 0.0
        %v2622 = vmax.f32 %v2480, 0.0
        %v2623 = vmax.f32 %v2485, 0.0
        %v2624 = vmax.f32 %v2490, 0.0
        %v2625 = vmax.f32 %v2495, 0.0
        %v2626 = vmax.f32 %v2500, 0.0
        %v2627 = vmax.f32 %v2505, 0.0
        %v2628 = vmax.f32 %v2510, 0.0
        %v2629 = vmax.f32 %v2515, 0.0
        %v2630 = vmax.f32 %v2520, 0.0
        %v2631 = vmax.f32 %v2525, 0.0
        %v2632 = vmax.f32 %v2530, 0.0
        %v2633 = vmax.f32 %v2535, 0.0
        %v2634 = vmax.f32 %v2540, 0.0
        %v2635 = vmax.f32 %v2545, 0.0
        %v2636 = vmax.f32 %v2550, 0.0
        %v2637 = vmax.f32 %v2555, 0.0
        %v2638 = vmax.f32 %v2560, 0.0
        %v2639 = vmax.f32 %v2565, 0.0
        %v2640 = vmax.f32 %v2570, 0.0
        %v2641 = vmax.f32 %v2575, 0.0
        %v2642 = vmax.f32 %v2580, 0.0
        %v2643 = vmax.f32 %v2585, 0.0
        %v2644 = vmax.f32 %v2590, 0.0
        %v2645 = vmax.f32 %v2595, 0.0
        %v2646 = vmax.f32 %v2600, 0.0
        %v2647 = vmax.f32 %v2605, 0.0
        %v2648 = vmax.f32 %v2610, 0.0
        %v2649 = vmax.f32 %v2615, 0.0
        %v2650 = vld [vmem:[%s5] sm:$0xff]
        %v2651 = vld [vmem:[%s5 + $0x8] sm:$0xff]
        %v2652 = vld [vmem:[%s5 + $0x10] sm:$0xff]
        %v2653 = vld [vmem:[%s5 + $0x18] sm:$0xff]
        %v2655 = vsel %vm700, %v2618, 0
        %v2658 = vsel %vm700, %v2619, 0
        %v2661 = vsel %vm700, %v2620, 0
        %v2664 = vsel %vm700, %v2621, 0
        %v2667 = vsel %vm700, %v2622, 0
        %v2670 = vsel %vm700, %v2623, 0
        %v2673 = vsel %vm700, %v2624, 0
        %v2676 = vsel %vm700, %v2625, 0
        %v2679 = vsel %vm700, %v2626, 0
        %v2682 = vsel %vm700, %v2627, 0
        %v2685 = vsel %vm700, %v2628, 0
        %v2688 = vsel %vm700, %v2629, 0
        %v2691 = vsel %vm700, %v2630, 0
        %v2694 = vsel %vm700, %v2631, 0
        %v2697 = vsel %vm700, %v2632, 0
        %v2700 = vsel %vm700, %v2633, 0
        %v2703 = vsel %vm700, %v2634, 0
        %v2706 = vsel %vm700, %v2635, 0
        %v2709 = vsel %vm700, %v2636, 0
        %v2712 = vsel %vm700, %v2637, 0
        %v2715 = vsel %vm700, %v2638, 0
        %v2718 = vsel %vm700, %v2639, 0
        %v2721 = vsel %vm700, %v2640, 0
        %v2724 = vsel %vm700, %v2641, 0
        %v2727 = vsel %vm700, %v2642, 0
        %v2730 = vsel %vm700, %v2643, 0
        %v2733 = vsel %vm700, %v2644, 0
        %v2736 = vsel %vm700, %v2645, 0
        %v2739 = vsel %vm700, %v2646, 0
        %v2742 = vsel %vm700, %v2647, 0
        %v2745 = vsel %vm700, %v2648, 0
        %v2748 = vsel %vm700, %v2649, 0
        %2750 = vmatprep.subr.mxu0 0.0
        %2751 = vmatpush1.msra.mxu0 %v2650
        %2752 = vmatprep.subr.mxu0 0.0
        %2753 = vmatpush1.msra.mxu0 %v2651
        %2754 = vmatprep.subr.mxu0 0.0
        %2755 = vmatpush1.msra.mxu0 %v2652
        %2756 = vmatprep.subr.mxu0 0.0
        %2757 = vmatpush1.msra.mxu0 %v2653
        %2758 = vmatprep.subr.mxu0 0.0
        %2759 = vmatpush1.msra.mxu0 0.0
        %2760 = vmatprep.subr.mxu0 0.0
        %2761 = vmatpush1.msra.mxu0 0.0
        %2762 = vmatprep.subr.mxu0 0.0
        %2763 = vmatpush1.msra.mxu0 0.0
        %2764 = vmatprep.subr.mxu0 0.0
        %2765 = vmatpush1.msra.mxu0 0.0
        %2766 = vmatprep.subr.mxu0 0.0
        %2767 = vmatpush1.msra.mxu0 0.0
        %2768 = vmatprep.subr.mxu0 0.0
        %2769 = vmatpush1.msra.mxu0 0.0
        %2770 = vmatprep.subr.mxu0 0.0
        %2771 = vmatpush1.msra.mxu0 0.0
        %2772 = vmatprep.subr.mxu0 0.0
        %2773 = vmatpush1.msra.mxu0 0.0
        %2774 = vmatprep.subr.mxu0 0.0
        %2775 = vmatpush1.msra.mxu0 0.0
        %2776 = vmatprep.subr.mxu0 0.0
        %2777 = vmatpush1.msra.mxu0 0.0
        %2778 = vmatprep.subr.mxu0 0.0
        %2779 = vmatpush1.msra.mxu0 0.0
        %2780 = vmatprep.subr.mxu0 0.0
        %2781 = vmatpush1.msra.mxu0 0.0
        %2782 = vmatprep.subr.mxu0 0.0
        %2783 = vmatpush1.msra.mxu0 0.0
        %2784 = vmatprep.subr.mxu0 0.0
        %2785 = vmatpush1.msra.mxu0 0.0
        %2786 = vmatprep.subr.mxu0 0.0
        %2787 = vmatpush1.msra.mxu0 0.0
        %2788 = vmatprep.subr.mxu0 0.0
        %2789 = vmatpush1.msra.mxu0 0.0
        %2790 = vmatprep.subr.mxu0 0.0
        %2791 = vmatpush1.msra.mxu0 0.0
        %2792 = vmatprep.subr.mxu0 0.0
        %2793 = vmatpush1.msra.mxu0 0.0
        %2794 = vmatprep.subr.mxu0 0.0
        %2795 = vmatpush1.msra.mxu0 0.0
        %2796 = vmatprep.subr.mxu0 0.0
        %2797 = vmatpush1.msra.mxu0 0.0
        %2798 = vmatprep.subr.mxu0 0.0
        %2799 = vmatpush1.msra.mxu0 0.0
        %2800 = vmatprep.subr.mxu0 0.0
        %2801 = vmatpush1.msra.mxu0 0.0
        %2802 = vmatprep.subr.mxu0 0.0
        %2803 = vmatpush1.msra.mxu0 0.0
        %2804 = vmatprep.subr.mxu0 0.0
        %2805 = vmatpush1.msra.mxu0 0.0
        %2806 = vmatprep.subr.mxu0 0.0
        %2807 = vmatpush1.msra.mxu0 0.0
        %2808 = vmatprep.subr.mxu0 0.0
        %2809 = vmatpush1.msra.mxu0 0.0
        %2810 = vmatprep.subr.mxu0 0.0
        %2811 = vmatpush1.msra.mxu0 0.0
        %2812 = vmatprep.subr.mxu0 0.0
        %2813 = vmatpush1.msra.mxu0 0.0
        %2814 = vmatprep.mubr.f32.mxu0 0.0
        %2815 = vmatmul.mubr.f32.gmra.mrb[0].mxu0 %v2655
        %v2816 = vpop.f32.mrb[0].mxu0
        %v2817 = vadd.f32 0.0, %v2816
        %v2818 = vpop.f32.mrb[0].mxu0
        %2819 = vmatprep.mubr.f32.mxu0 0.0
        %2820 = vmatmul.mubr.f32.gmra.mrb[0].mxu0 %v2658
        %v2821 = vpop.f32.mrb[0].mxu0
        %v2822 = vadd.f32 0.0, %v2821
        %v2823 = vpop.f32.mrb[0].mxu0
        %2824 = vmatprep.mubr.f32.mxu0 0.0
        %2825 = vmatmul.mubr.f32.gmra.mrb[0].mxu0 %v2661
        %v2826 = vpop.f32.mrb[0].mxu0
        %v2827 = vadd.f32 0.0, %v2826
        %v2828 = vpop.f32.mrb[0].mxu0
        %2829 = vmatprep.mubr.f32.mxu0 0.0
        %2830 = vmatmul.mubr.f32.gmra.mrb[0].mxu0 %v2664
        %v2831 = vpop.f32.mrb[0].mxu0
        %v2832 = vadd.f32 0.0, %v2831
        %v2833 = vpop.f32.mrb[0].mxu0
        %2834 = vmatprep.mubr.f32.mxu0 0.0
        %2835 = vmatmul.mubr.f32.gmra.mrb[0].mxu0 %v2667
        %v2836 = vpop.f32.mrb[0].mxu0
        %v2837 = vadd.f32 0.0, %v2836
        %v2838 = vpop.f32.mrb[0].mxu0
        %2839 = vmatprep.mubr.f32.mxu0 0.0
        %2840 = vmatmul.mubr.f32.gmra.mrb[0].mxu0 %v2670
        %v2841 = vpop.f32.mrb[0].mxu0
        %v2842 = vadd.f32 0.0, %v2841
        %v2843 = vpop.f32.mrb[0].mxu0
        %2844 = vmatprep.mubr.f32.mxu0 0.0
        %2845 = vmatmul.mubr.f32.gmra.mrb[0].mxu0 %v2673
        %v2846 = vpop.f32.mrb[0].mxu0
        %v2847 = vadd.f32 0.0, %v2846
        %v2848 = vpop.f32.mrb[0].mxu0
        %2849 = vmatprep.mubr.f32.mxu0 0.0
        %2850 = vmatmul.mubr.f32.gmra.mrb[0].mxu0 %v2676
        %v2851 = vpop.f32.mrb[0].mxu0
        %v2852 = vadd.f32 0.0, %v2851
        %v2853 = vpop.f32.mrb[0].mxu0
        %2854 = vmatprep.mubr.f32.mxu0 0.0
        %2855 = vmatmul.mubr.f32.gmra.mrb[0].mxu0 %v2679
        %v2856 = vpop.f32.mrb[0].mxu0
        %v2857 = vadd.f32 0.0, %v2856
        %v2858 = vpop.f32.mrb[0].mxu0
        %2859 = vmatprep.mubr.f32.mxu0 0.0
        %2860 = vmatmul.mubr.f32.gmra.mrb[0].mxu0 %v2682
        %v2861 = vpop.f32.mrb[0].mxu0
        %v2862 = vadd.f32 0.0, %v2861
        %v2863 = vpop.f32.mrb[0].mxu0
        %2864 = vmatprep.mubr.f32.mxu0 0.0
        %2865 = vmatmul.mubr.f32.gmra.mrb[0].mxu0 %v2685
        %v2866 = vpop.f32.mrb[0].mxu0
        %v2867 = vadd.f32 0.0, %v2866
        %v2868 = vpop.f32.mrb[0].mxu0
        %2869 = vmatprep.mubr.f32.mxu0 0.0
        %2870 = vmatmul.mubr.f32.gmra.mrb[0].mxu0 %v2688
        %v2871 = vpop.f32.mrb[0].mxu0
        %v2872 = vadd.f32 0.0, %v2871
        %v2873 = vpop.f32.mrb[0].mxu0
        %2874 = vmatprep.mubr.f32.mxu0 0.0
        %2875 = vmatmul.mubr.f32.gmra.mrb[0].mxu0 %v2691
        %v2876 = vpop.f32.mrb[0].mxu0
        %v2877 = vadd.f32 0.0, %v2876
        %v2878 = vpop.f32.mrb[0].mxu0
        %2879 = vmatprep.mubr.f32.mxu0 0.0
        %2880 = vmatmul.mubr.f32.gmra.mrb[0].mxu0 %v2694
        %v2881 = vpop.f32.mrb[0].mxu0
        %v2882 = vadd.f32 0.0, %v2881
        %v2883 = vpop.f32.mrb[0].mxu0
        %2884 = vmatprep.mubr.f32.mxu0 0.0
        %2885 = vmatmul.mubr.f32.gmra.mrb[0].mxu0 %v2697
        %v2886 = vpop.f32.mrb[0].mxu0
        %v2887 = vadd.f32 0.0, %v2886
        %v2888 = vpop.f32.mrb[0].mxu0
        %2889 = vmatprep.mubr.f32.mxu0 0.0
        %2890 = vmatmul.mubr.f32.gmra.mrb[0].mxu0 %v2700
        %v2891 = vpop.f32.mrb[0].mxu0
        %v2892 = vadd.f32 0.0, %v2891
        %v2893 = vpop.f32.mrb[0].mxu0
        %2894 = vmatprep.mubr.f32.mxu0 0.0
        %2895 = vmatmul.mubr.f32.gmra.mrb[0].mxu0 %v2703
        %v2896 = vpop.f32.mrb[0].mxu0
        %v2897 = vadd.f32 0.0, %v2896
        %v2898 = vpop.f32.mrb[0].mxu0
        %2899 = vmatprep.mubr.f32.mxu0 0.0
        %2900 = vmatmul.mubr.f32.gmra.mrb[0].mxu0 %v2706
        %v2901 = vpop.f32.mrb[0].mxu0
        %v2902 = vadd.f32 0.0, %v2901
        %v2903 = vpop.f32.mrb[0].mxu0
        %2904 = vmatprep.mubr.f32.mxu0 0.0
        %2905 = vmatmul.mubr.f32.gmra.mrb[0].mxu0 %v2709
        %v2906 = vpop.f32.mrb[0].mxu0
        %v2907 = vadd.f32 0.0, %v2906
        %v2908 = vpop.f32.mrb[0].mxu0
        %2909 = vmatprep.mubr.f32.mxu0 0.0
        %2910 = vmatmul.mubr.f32.gmra.mrb[0].mxu0 %v2712
        %v2911 = vpop.f32.mrb[0].mxu0
        %v2912 = vadd.f32 0.0, %v2911
        %v2913 = vpop.f32.mrb[0].mxu0
        %2914 = vmatprep.mubr.f32.mxu0 0.0
        %2915 = vmatmul.mubr.f32.gmra.mrb[0].mxu0 %v2715
        %v2916 = vpop.f32.mrb[0].mxu0
        %v2917 = vadd.f32 0.0, %v2916
        %v2918 = vpop.f32.mrb[0].mxu0
        %2919 = vmatprep.mubr.f32.mxu0 0.0
        %2920 = vmatmul.mubr.f32.gmra.mrb[0].mxu0 %v2718
        %v2921 = vpop.f32.mrb[0].mxu0
        %v2922 = vadd.f32 0.0, %v2921
        %v2923 = vpop.f32.mrb[0].mxu0
        %2924 = vmatprep.mubr.f32.mxu0 0.0
        %2925 = vmatmul.mubr.f32.gmra.mrb[0].mxu0 %v2721
        %v2926 = vpop.f32.mrb[0].mxu0
        %v2927 = vadd.f32 0.0, %v2926
        %v2928 = vpop.f32.mrb[0].mxu0
        %2929 = vmatprep.mubr.f32.mxu0 0.0
        %2930 = vmatmul.mubr.f32.gmra.mrb[0].mxu0 %v2724
        %v2931 = vpop.f32.mrb[0].mxu0
        %v2932 = vadd.f32 0.0, %v2931
        %v2933 = vpop.f32.mrb[0].mxu0
        %2934 = vmatprep.mubr.f32.mxu0 0.0
        %2935 = vmatmul.mubr.f32.gmra.mrb[0].mxu0 %v2727
        %v2936 = vpop.f32.mrb[0].mxu0
        %v2937 = vadd.f32 0.0, %v2936
        %v2938 = vpop.f32.mrb[0].mxu0
        %2939 = vmatprep.mubr.f32.mxu0 0.0
        %2940 = vmatmul.mubr.f32.gmra.mrb[0].mxu0 %v2730
        %v2941 = vpop.f32.mrb[0].mxu0
        %v2942 = vadd.f32 0.0, %v2941
        %v2943 = vpop.f32.mrb[0].mxu0
        %2944 = vmatprep.mubr.f32.mxu0 0.0
        %2945 = vmatmul.mubr.f32.gmra.mrb[0].mxu0 %v2733
        %v2946 = vpop.f32.mrb[0].mxu0
        %v2947 = vadd.f32 0.0, %v2946
        %v2948 = vpop.f32.mrb[0].mxu0
        %2949 = vmatprep.mubr.f32.mxu0 0.0
        %2950 = vmatmul.mubr.f32.gmra.mrb[0].mxu0 %v2736
        %v2951 = vpop.f32.mrb[0].mxu0
        %v2952 = vadd.f32 0.0, %v2951
        %v2953 = vpop.f32.mrb[0].mxu0
        %2954 = vmatprep.mubr.f32.mxu0 0.0
        %2955 = vmatmul.mubr.f32.gmra.mrb[0].mxu0 %v2739
        %v2956 = vpop.f32.mrb[0].mxu0
        %v2957 = vadd.f32 0.0, %v2956
        %v2958 = vpop.f32.mrb[0].mxu0
        %2959 = vmatprep.mubr.f32.mxu0 0.0
        %2960 = vmatmul.mubr.f32.gmra.mrb[0].mxu0 %v2742
        %v2961 = vpop.f32.mrb[0].mxu0
        %v2962 = vadd.f32 0.0, %v2961
        %v2963 = vpop.f32.mrb[0].mxu0
        %2964 = vmatprep.mubr.f32.mxu0 0.0
        %2965 = vmatmul.mubr.f32.gmra.mrb[0].mxu0 %v2745
        %v2966 = vpop.f32.mrb[0].mxu0
        %v2967 = vadd.f32 0.0, %v2966
        %v2968 = vpop.f32.mrb[0].mxu0
        %2969 = vmatprep.mubr.f32.mxu0 0.0
        %2970 = vmatmul.mubr.f32.gmra.mrb[0].mxu0 %v2748
        %v2971 = vpop.f32.mrb[0].mxu0
        %v2972 = vadd.f32 0.0, %v2971
        %v2973 = vpop.f32.mrb[0].mxu0
        %2974 = vdwg.mxu0
        %vm2975 = vcmask 7168
        %v2976 = vsel %vm2975, %v2817, 0.0
        %v2977 = vsel %vm2975, %v2822, 0.0
        %v2978 = vadd.f32 %v2976, %v2977
        %v2979 = vsel %vm2975, %v2827, 0.0
        %v2980 = vadd.f32 %v2978, %v2979
        %v2981 = vsel %vm2975, %v2832, 0.0
        %v2982 = vadd.f32 %v2980, %v2981
        %v2983 = vsel %vm2975, %v2837, 0.0
        %v2984 = vadd.f32 %v2982, %v2983
        %v2985 = vsel %vm2975, %v2842, 0.0
        %v2986 = vadd.f32 %v2984, %v2985
        %v2987 = vsel %vm2975, %v2847, 0.0
        %v2988 = vadd.f32 %v2986, %v2987
        %v2989 = vsel %vm2975, %v2852, 0.0
        %v2990 = vadd.f32 %v2988, %v2989
        %v2991 = vsel %vm2975, %v2857, 0.0
        %v2992 = vadd.f32 %v2990, %v2991
        %v2993 = vsel %vm2975, %v2862, 0.0
        %v2994 = vadd.f32 %v2992, %v2993
        %v2995 = vsel %vm2975, %v2867, 0.0
        %v2996 = vadd.f32 %v2994, %v2995
        %v2997 = vsel %vm2975, %v2872, 0.0
        %v2998 = vadd.f32 %v2996, %v2997
        %v2999 = vsel %vm2975, %v2877, 0.0
        %v3000 = vadd.f32 %v2998, %v2999
        %v3001 = vsel %vm2975, %v2882, 0.0
        %v3002 = vadd.f32 %v3000, %v3001
        %v3003 = vsel %vm2975, %v2887, 0.0
        %v3004 = vadd.f32 %v3002, %v3003
        %v3005 = vsel %vm2975, %v2892, 0.0
        %v3006 = vadd.f32 %v3004, %v3005
        %v3007 = vsel %vm2975, %v2897, 0.0
        %v3008 = vadd.f32 %v3006, %v3007
        %v3009 = vsel %vm2975, %v2902, 0.0
        %v3010 = vadd.f32 %v3008, %v3009
        %v3011 = vsel %vm2975, %v2907, 0.0
        %v3012 = vadd.f32 %v3010, %v3011
        %v3013 = vsel %vm2975, %v2912, 0.0
        %v3014 = vadd.f32 %v3012, %v3013
        %v3015 = vsel %vm2975, %v2917, 0.0
        %v3016 = vadd.f32 %v3014, %v3015
        %v3017 = vsel %vm2975, %v2922, 0.0
        %v3018 = vadd.f32 %v3016, %v3017
        %v3019 = vsel %vm2975, %v2927, 0.0
        %v3020 = vadd.f32 %v3018, %v3019
        %v3021 = vsel %vm2975, %v2932, 0.0
        %v3022 = vadd.f32 %v3020, %v3021
        %v3023 = vsel %vm2975, %v2937, 0.0
        %v3024 = vadd.f32 %v3022, %v3023
        %v3025 = vsel %vm2975, %v2942, 0.0
        %v3026 = vadd.f32 %v3024, %v3025
        %v3027 = vsel %vm2975, %v2947, 0.0
        %v3028 = vadd.f32 %v3026, %v3027
        %v3029 = vsel %vm2975, %v2952, 0.0
        %v3030 = vadd.f32 %v3028, %v3029
        %v3031 = vsel %vm2975, %v2957, 0.0
        %v3032 = vadd.f32 %v3030, %v3031
        %v3033 = vsel %vm2975, %v2962, 0.0
        %v3034 = vadd.f32 %v3032, %v3033
        %v3035 = vsel %vm2975, %v2967, 0.0
        %v3036 = vadd.f32 %v3034, %v3035
        %v3037 = vsel %vm2975, %v2972, 0.0
        %v3038 = vadd.f32 %v3036, %v3037
        %v3039 = vrot.slane %v3038, 4
        %v3040 = vadd.f32 %v3038, %v3039
        %v3041 = vrot.slane %v3040, 2
        %v3042 = vadd.f32 %v3040, %v3041
        %v3043 = vrot.slane %v3042, 1
        %v3044 = vadd.f32 %v3042, %v3043
        %v3045 = vld [vmem:[#allocation3] sm:$0x1]
        %v3046 = vadd.f32 %v3044, %v3045
        %v3047 = vxor.u32 %v3046, 2147483648
        %v3048 = vmul.f32 %v3047, 1.442695
        %v3049 = vpow.pop %v3048
        %v3050 = vadd.f32 %v3049, 1.0
        %v3051 = vrcp.pop %v3050
        %v3052 = vmul.f32 1.0, %v3051
        %vm3053 = vcmask 0
        %3054 = vst.msk [vmem:[%s296] sm:$0x1] %vm3053, %v3052
        %p3055 = scmp.lt.s32.totalorder %s23, 1
        %s3056 = scalar_select %p3055, %s23, 1
        %s3057 = scalar_lea.vmem %s7, %s3056
        // Predicated region
        $region53: #{tpu_custom_call.1} parent=47 // pred_check
          %p3058 = pneg %p193
        $region54: #{tpu_custom_call.1} parent=47 // pred_check_branch
          %3060 = sbr.rel (%p3058) target = $region56
        $region55: #{tpu_custom_call.1} parent=47 // pred_region
          _
        $region56: #{tpu_custom_call.1} parent=47 // pred_fallthru
          _
      $region48: #{tpu_custom_call.1} parent=5 // pred_fallthru
        _
      %p3061 = scmp.le.s32.totalorder 2, %s18
      // Predicated region
      $region57: #{tpu_custom_call.1} parent=5 // pred_check
        %p3062 = pneg %p3061
      $region58: #{tpu_custom_call.1} parent=5 // pred_check_branch
        %3064 = sbr.rel (%p3062) target = $region60
      $region59: #{tpu_custom_call.1} parent=5 // pred_region
        %s3065 = ssub.s32 %s18, 2
        // Predicated region
        $region61: #{tpu_custom_call.1} parent=59 // pred_check
          %p3066 = pneg %p199
        $region62: #{tpu_custom_call.1} parent=59 // pred_check_branch
          %3068 = sbr.rel (%p3066) target = $region64
        $region63: #{tpu_custom_call.1} parent=59 // pred_region
          %p3069 = scmp.lt.s32.totalorder %s24, 1
          %s3070 = scalar_select %p3069, %s24, 1
          %s3071 = scalar_lea.vmem %s7, %s3070
        $region64: #{tpu_custom_call.1} parent=59 // pred_fallthru
          _
      $region60: #{tpu_custom_call.1} parent=5 // pred_fallthru
        _
    $region6: #{tpu_custom_call.1} parent=1 // loop_footer
      %s22 = sadd.s32 1, %s18
    $region7: #{tpu_custom_call.1} parent=1 // loop_footer_branch
      %17 = sbr.rel target = $region3
    $region8: #{tpu_custom_call.1} parent=1 // loop_exit
      _
    %3072 = vsyncpa [#allocation5], 1
    %s3073 = scalar_lea.sflag [#allocation5], 1
    %3074 = vsyncpa %s3073, 1

</llo_original>
